<compile_context>
chip_gen: v6e
topology: v6e:2x2x1
jax: 0.10.0
libtpu: 0.0.40
codegen_flags: <defaults>
</compile_context>

<pallas_src>
import functools

import jax
import jax.numpy as jnp
from jax import lax
from jax.experimental import pallas as pl
from jax.experimental.pallas import tpu as pltpu

EPS = 1e-5                      # nn.BatchNorm2d default eps
NEG_SLOPE = 0.1                 # nn.LeakyReLU(negative_slope=0.1)
LANE = 128                      # TPU lane width
VMEM_LIMIT = 32 * 1024 * 1024   # fits v5e / v6e / v7x scoped-VMEM budgets

# matmul tile caps: f32 X + bf16 W + f32 out/add, double-buffered -> ~3 MiB,
# well under the 32 MiB scoped limit on every generation (incl. v7x's 64 MiB).
TM_CAP, TN_CAP, TK_CAP = 256, 256, 512


def _round_up(n, m):
    return ((n + m - 1) // m) * m


def _tile(n, cap, mult):
    """Largest divisor of n that is <= cap and a multiple of mult (else n)."""
    if n <= cap:
        return n
    t = (cap // mult) * mult
    while t >= mult:
        if n % t == 0:
            return t
        t -= mult
    return n


# ----------------------------------------------------------------------------
# Kernel 1: BatchNorm batch statistics -> per-channel (scale, shift)
#   scale = gamma * rsqrt(var + eps),  shift = beta - mean * scale
# Single pass (sum, sum of squares) accumulated across the M grid axis.
# ----------------------------------------------------------------------------
def _bn_stats_kernel(x_ref, gamma_ref, beta_ref, scale_ref, shift_ref,
                     sum_ref, sq_ref, *, inv_count):
    i = pl.program_id(0)

    @pl.when(i == 0)
    def _():
        sum_ref[...] = jnp.zeros_like(sum_ref)
        sq_ref[...] = jnp.zeros_like(sq_ref)

    x = x_ref[...]
    sum_ref[...] += jnp.sum(x, axis=0, keepdims=True)
    sq_ref[...] += jnp.sum(x * x, axis=0, keepdims=True)

    @pl.when(i == pl.num_programs(0) - 1)
    def _():
        mean = sum_ref[...] * inv_count
        var = sq_ref[...] * inv_count - mean * mean   # biased var (training mode)
        scale = gamma_ref[...] * lax.rsqrt(var + EPS)
        scale_ref[...] = scale
        shift_ref[...] = beta_ref[...] - mean * scale


def bn_scale_shift(x2d, gamma, beta):
    """x2d: (M, C) f32.  Returns (scale, shift), each (1, C) f32."""
    M, C = x2d.shape
    tm = _tile(M, 256, 8)                    # multi-step reduction grid over M
    grid = (M // tm,)
    kernel = functools.partial(_bn_stats_kernel, inv_count=1.0 / M)
    return pl.pallas_call(
        kernel,
        out_shape=(jax.ShapeDtypeStruct((1, C), jnp.float32),
                   jax.ShapeDtypeStruct((1, C), jnp.float32)),
        grid_spec=pltpu.PrefetchScalarGridSpec(
            num_scalar_prefetch=0,
            grid=grid,
            in_specs=[pl.BlockSpec((tm, C), lambda i: (i, 0)),
                      pl.BlockSpec((1, C), lambda i: (0, 0)),
                      pl.BlockSpec((1, C), lambda i: (0, 0))],
            out_specs=(pl.BlockSpec((1, C), lambda i: (0, 0)),
                       pl.BlockSpec((1, C), lambda i: (0, 0))),
            scratch_shapes=[pltpu.VMEM((1, C), jnp.float32),
                            pltpu.VMEM((1, C), jnp.float32)]),
        compiler_params=pltpu.CompilerParams(
            dimension_semantics=("arbitrary",),
            vmem_limit_bytes=VMEM_LIMIT),
        cost_estimate=pl.CostEstimate(flops=3 * M * C, transcendentals=0,
                                      bytes_accessed=4 * M * C),
    )(x2d, gamma.reshape(1, C).astype(jnp.float32),
      beta.reshape(1, C).astype(jnp.float32))


# ----------------------------------------------------------------------------
# Kernel 2: fused  out = LeakyReLU(x * scale + shift) @ W + bias [+ residual]
# X tiles arrive f32 (raw, pre-BN); BN affine + LeakyReLU prologue runs on the
# VPU; the matmul runs on the MXU in bf16 with an f32 VMEM accumulator.
# ----------------------------------------------------------------------------
def _fused_bn_matmul_kernel(x_ref, scale_ref, shift_ref, w_ref, b_ref, *rest):
    if len(rest) == 3:
        add_ref, o_ref, acc_ref = rest
    else:
        add_ref = None
        o_ref, acc_ref = rest

    k = pl.program_id(2)

    @pl.when(k == 0)
    def _():
        acc_ref[...] = jnp.zeros_like(acc_ref)

    y = x_ref[...] * scale_ref[...] + shift_ref[...]
    y = jnp.where(y > 0, y, NEG_SLOPE * y)
    acc_ref[...] += jnp.dot(y.astype(jnp.bfloat16), w_ref[...],
                            preferred_element_type=jnp.float32)

    @pl.when(k == pl.num_programs(2) - 1)
    def _():
        out = acc_ref[...] + b_ref[...]
        if add_ref is not None:
            out = out + add_ref[...]
        o_ref[...] = out.astype(o_ref.dtype)


def fused_bn_lrelu_matmul(x, scale_k, shift_k, w, b, add=None):
    """x:(M,K) f32 raw, scale_k/shift_k:(1,K) f32, w:(K,N) bf16, b:(1,N) f32,
    add:(M,N) f32 or None.  Returns (M,N) f32."""
    M, K = x.shape
    Kw, N = w.shape
    assert Kw == K and scale_k.shape == (1, K) and shift_k.shape == (1, K)
    assert b.shape == (1, N)

    tm = _tile(M, TM_CAP, 8)
    tn = _tile(N, TN_CAP, LANE)
    tk = _tile(K, TK_CAP, LANE)
    grid = (M // tm, N // tn, K // tk)

    in_specs = [
        pl.BlockSpec((tm, tk), lambda i, j, k: (i, k)),
        pl.BlockSpec((1, tk), lambda i, j, k: (0, k)),
        pl.BlockSpec((1, tk), lambda i, j, k: (0, k)),
        pl.BlockSpec((tk, tn), lambda i, j, k: (k, j)),
        pl.BlockSpec((1, tn), lambda i, j, k: (0, j)),
    ]
    args = [x, scale_k, shift_k, w, b]
    if add is not None:
        assert add.shape == (M, N)
        in_specs.append(pl.BlockSpec((tm, tn), lambda i, j, k: (i, j)))
        args.append(add)

    bytes_accessed = (4 * M * K + 2 * K * N + 4 * M * N
                      + (4 * M * N if add is not None else 0))
    return pl.pallas_call(
        _fused_bn_matmul_kernel,
        out_shape=jax.ShapeDtypeStruct((M, N), jnp.float32),
        grid_spec=pltpu.PrefetchScalarGridSpec(
            num_scalar_prefetch=0,
            grid=grid,
            in_specs=in_specs,
            out_specs=pl.BlockSpec((tm, tn), lambda i, j, k: (i, j)),
            scratch_shapes=[pltpu.VMEM((tm, tn), jnp.float32)]),
        compiler_params=pltpu.CompilerParams(
            dimension_semantics=("parallel", "parallel", "arbitrary"),
            vmem_limit_bytes=VMEM_LIMIT),
        cost_estimate=pl.CostEstimate(flops=2 * M * K * N, transcendentals=0,
                                      bytes_accessed=int(bytes_accessed)),
    )(*args)


# ----------------------------------------------------------------------------
# Plain-JAX glue: lane padding, per-channel spatial padding, im2col
# ----------------------------------------------------------------------------
def _pad_cols(a, mult=LANE):
    k = a.shape[-1]
    kp = _round_up(k, mult)
    if kp == k:
        return a
    return jnp.pad(a, ((0, 0), (0, kp - k)))


def _bn_zero_preimage(scale, shift):
    # Raw value v with LeakyReLU(v*scale + shift) == 0, used as the spatial-pad
    # value so the fused BN prologue reproduces "pad the activated tensor with
    # zeros".  (gamma == 0 -> scale == 0 is degenerate and mapped to 0.)
    safe = jnp.where(scale == 0.0, 1.0, scale)
    return jnp.where(scale == 0.0, 0.0, -shift / safe)


def _pad_hw_with_value(x_nhwc, pad_c):
    B, H, W, C = x_nhwc.shape
    canvas = jnp.broadcast_to(pad_c.reshape(1, 1, 1, C), (B, H + 2, W + 2, C))
    canvas = canvas.astype(x_nhwc.dtype)
    return lax.dynamic_update_slice(canvas, x_nhwc, (0, 1, 1, 0))


def _im2col3x3(xp, stride, Ho, Wo):
    """xp: spatially padded NHWC.  Returns (B*Ho*Wo, 9*C) patches
    (tap-major, channel-minor), matching the (kh, kw, cin, cout) weight layout."""
    B, _, _, C = xp.shape
    cols = []
    for kh in range(3):
        for kw in range(3):
            cols.append(xp[:, kh:kh + stride * (Ho - 1) + 1:stride,
                            kw:kw + stride * (Wo - 1) + 1:stride, :])
    return jnp.concatenate(cols, axis=-1).reshape(B * Ho * Wo, 9 * C)


# ----------------------------------------------------------------------------
# TransitionBlock forward
# ----------------------------------------------------------------------------
def transition_block_forward(x_nchw, params, stride):
    B, Cin, H, W = x_nchw.shape
    Cout = params["bn2_gamma"].shape[0]
    Ho = (H + 2 - 3) // stride + 1
    Wo = (W + 2 - 3) // stride + 1
    M = B * Ho * Wo

    x = jnp.transpose(x_nchw, (0, 2, 3, 1)).astype(jnp.float32)        # NHWC

    # -- BN1 batch statistics (Pallas reduction kernel) ---------------------
    scale1, shift1 = bn_scale_shift(x.reshape(B * H * W, Cin),
                                    params["bn1_gamma"], params["bn1_beta"])

    # -- shortcut: 1x1 stride-s conv, BN1 + LeakyReLU fused as prologue -----
    x_s = x[:, ::stride, ::stride, :].reshape(M, Cin)
    identity = fused_bn_lrelu_matmul(
        _pad_cols(x_s), _pad_cols(scale1), _pad_cols(shift1),
        params["w_sc"], params["b_sc"])                                 # (M, Np)

    # -- conv1: 3x3 / pad 1 / stride s, BN1 + LeakyReLU fused as prologue ---
    pad1 = _bn_zero_preimage(scale1, shift1)
    p1 = _im2col3x3(_pad_hw_with_value(x, pad1), stride, Ho, Wo)        # (M, 9*Cin)
    out1 = fused_bn_lrelu_matmul(
        _pad_cols(p1), _pad_cols(jnp.tile(scale1, (1, 9))),
        _pad_cols(jnp.tile(shift1, (1, 9))),
        params["w1"], params["b1"])                                     # raw conv1 out

    # -- BN2 batch statistics on the raw conv1 output ------------------------
    o1 = out1[:, :Cout]
    scale2, shift2 = bn_scale_shift(o1, params["bn2_gamma"], params["bn2_beta"])

    # -- conv2: 3x3 / pad 1 / stride 1, BN2 prologue + fused residual add ----
    pad2 = _bn_zero_preimage(scale2, shift2)
    p2 = _im2col3x3(_pad_hw_with_value(o1.reshape(B, Ho, Wo, Cout), pad2),
                    1, Ho, Wo)                                          # (M, 9*Cout)
    out2 = fused_bn_lrelu_matmul(
        _pad_cols(p2), _pad_cols(jnp.tile(scale2, (1, 9))),
        _pad_cols(jnp.tile(shift2, (1, 9))),
        params["w2"], params["b2"], add=identity)                       # (M, Np)

    out = out2[:, :Cout].reshape(B, Ho, Wo, Cout)
    return jnp.transpose(out, (0, 3, 1, 2))                             # NCHW


# ----------------------------------------------------------------------------
# Parameter preparation (lane-padded matmul layouts, bf16 weights)
# ----------------------------------------------------------------------------
def make_params(w1_oihw, w2_oihw, wsc_oihw, b1, b2, bsc,
                bn1_gamma, bn1_beta, bn2_gamma, bn2_beta):
    out_f = w1_oihw.shape[0]
    Np = _round_up(out_f, LANE)

    def conv_w(w_oihw):
        O, I, KH, KW = w_oihw.shape
        w2d = jnp.transpose(w_oihw, (2, 3, 1, 0)).reshape(KH * KW * I, O)
        Kp = _round_up(w2d.shape[0], LANE)
        w2d = jnp.pad(w2d, ((0, Kp - w2d.shape[0]), (0, Np - O)))
        return w2d.astype(jnp.bfloat16)

    def pad_bias(b):
        return jnp.pad(b, (0, Np - b.shape[0])).astype(jnp.float32).reshape(1, Np)

    return {
        "w1": conv_w(w1_oihw), "w2": conv_w(w2_oihw), "w_sc": conv_w(wsc_oihw),
        "b1": pad_bias(b1), "b2": pad_bias(b2), "b_sc": pad_bias(bsc),
        "bn1_gamma": bn1_gamma, "bn1_beta": bn1_beta,
        "bn2_gamma": bn2_gamma, "bn2_beta": bn2_beta,
    }


# ----------------------------------------------------------------------------
# Pure-JAX reference (f32 everywhere) for correctness check
# ----------------------------------------------------------------------------
def reference_forward(x, tp, stride):
    def bn_relu(x, g, b):
        mean = x.mean(axis=(0, 2, 3), keepdims=True)
        var = ((x - mean) ** 2).mean(axis=(0, 2, 3), keepdims=True)
        y = (x - mean) / jnp.sqrt(var + EPS) * g.reshape(1, -1, 1, 1) + b.reshape(1, -1, 1, 1)
        return jnp.where(y > 0, y, NEG_SLOPE * y)

    def conv(x, w, b, s, pad):
        y = lax.conv_general_dilated(x, w, (s, s), pad,
                                     dimension_numbers=("NCHW", "OIHW", "NCHW"))
        return y + b.reshape(1, -1, 1, 1)

    a = bn_relu(x, tp["bn1_gamma"], tp["bn1_beta"])
    identity = conv(a, tp["w_sc_oihw"], tp["b_sc"], stride, ((0, 0), (0, 0)))
    out = conv(a, tp["w1_oihw"], tp["b1"], stride, ((1, 1), (1, 1)))
    out = bn_relu(out, tp["bn2_gamma"], tp["bn2_beta"])
    out = conv(out, tp["w2_oihw"], tp["b2"], 1, ((1, 1), (1, 1)))
    return out + identity


# ----------------------------------------------------------------------------
# Main
# ----------------------------------------------------------------------------
if __name__ == "__main__":
    # TransitionBlock(in_f=4, out_f=8, downsample=True, bias=True)
    in_f, out_f = 4, 8
    downsample, use_bias = True, True
    stride = 2 if downsample else 1

    key = jax.random.PRNGKey(0)
    ks = jax.random.split(key, 10)

    x = jax.random.normal(ks[0], (2, in_f, 16, 16), jnp.float32)

    w1_oihw = 0.1 * jax.random.normal(ks[1], (out_f, in_f, 3, 3), jnp.float32)
    w2_oihw = 0.1 * jax.random.normal(ks[2], (out_f, out_f, 3, 3), jnp.float32)
    wsc_oihw = 0.1 * jax.random.normal(ks[3], (out_f, in_f, 1, 1), jnp.float32)
    b1 = 0.1 * jax.random.normal(ks[4], (out_f,), jnp.float32)
    b2 = 0.1 * jax.random.normal(ks[5], (out_f,), jnp.float32)
    bsc = 0.1 * jax.random.normal(ks[6], (out_f,), jnp.float32)

    bn1_gamma = 1.0 + 0.1 * jax.random.normal(ks[7], (in_f,), jnp.float32)
    bn1_beta = 0.1 * jax.random.normal(ks[8], (in_f,), jnp.float32)
    bn2_gamma = 1.0 + 0.1 * jax.random.normal(ks[9], (out_f,), jnp.float32)
    bn2_beta = jnp.zeros((out_f,), jnp.float32)

    params = make_params(w1_oihw, w2_oihw, wsc_oihw, b1, b2, bsc,
                         bn1_gamma, bn1_beta, bn2_gamma, bn2_beta)
    ref_params = {
        "w1_oihw": w1_oihw, "w2_oihw": w2_oihw, "w_sc_oihw": wsc_oihw,
        "b1": b1, "b2": b2, "b_sc": bsc,
        "bn1_gamma": bn1_gamma, "bn1_beta": bn1_beta,
        "bn2_gamma": bn2_gamma, "bn2_beta": bn2_beta,
    }

    forward = jax.jit(transition_block_forward, static_argnames="stride")
    out = jax.block_until_ready(forward(x, params, stride=stride))
    ref = jax.block_until_ready(reference_forward(x, ref_params, stride))

    assert out.shape == (2, out_f, 16 // stride, 16 // stride), out.shape
    err = float(jnp.max(jnp.abs(out - ref)))
    # bf16 MXU inputs (f32 accumulation) vs the all-f32 reference -> 5e-2 budget
    assert jnp.allclose(out, ref, rtol=5e-2, atol=5e-2), err

    print("KERNEL_OK")
</pallas_src>

<mosaic_0001>
module attributes {stable_mosaic.version = 11 : i64} {
  func.func @_bn_stats_kernel(%arg0: i32, %arg1: memref<256x4xf32, #tpu.memory_space<vmem>>, %arg2: memref<1x4xf32, #tpu.memory_space<vmem>>, %arg3: memref<1x4xf32, #tpu.memory_space<vmem>>, %arg4: memref<1x4xf32, #tpu.memory_space<vmem>>, %arg5: memref<1x4xf32, #tpu.memory_space<vmem>>, %arg6: memref<1x4xf32, #tpu.memory_space<vmem>>, %arg7: memref<1x4xf32, #tpu.memory_space<vmem>>) attributes {dimension_semantics = [#tpu.dimension_semantics<arbitrary>], iteration_bounds = array<i64: 2>, scalar_prefetch = 0 : i64, scratch_operands = 2 : i64, tpu.core_type = #tpu.core_type<tc>, window_params = [{transform_indices = @transform_0, window_bounds = array<i64: 256, 4>}, {pipeline_mode = #tpu.pipeline_mode<synchronous>, transform_indices = @transform_1, window_bounds = array<i64: 1, 4>}, {pipeline_mode = #tpu.pipeline_mode<synchronous>, transform_indices = @transform_2, window_bounds = array<i64: 1, 4>}, {pipeline_mode = #tpu.pipeline_mode<synchronous>, transform_indices = @transform_3, window_bounds = array<i64: 1, 4>}, {pipeline_mode = #tpu.pipeline_mode<synchronous>, transform_indices = @transform_4, window_bounds = array<i64: 1, 4>}]} {
    %c0_i32 = arith.constant 0 : i32
    %0 = arith.cmpi eq, %arg0, %c0_i32 : i32
    %1 = arith.extui %0 : i1 to i32
    %c0_i32_0 = arith.constant 0 : i32
    %2 = arith.cmpi ne, %1, %c0_i32_0 : i32
    scf.if %2 {
      %cst_12 = arith.constant 0.000000e+00 : f32
      %18 = vector.broadcast %cst_12 : f32 to vector<1x4xf32>
      %c0_13 = arith.constant 0 : index
      %c0_14 = arith.constant 0 : index
      %19 = vector.load %arg6[%c0_13, %c0_14] : memref<1x4xf32, #tpu.memory_space<vmem>>, vector<1x4xf32>
      tpu.vector_store %arg6[%c0_13, %c0_14], %18 {strides = array<i32>} : memref<1x4xf32, #tpu.memory_space<vmem>>, vector<1x4xf32>,
      %cst_15 = arith.constant 0.000000e+00 : f32
      %20 = vector.broadcast %cst_15 : f32 to vector<1x4xf32>
      %c0_16 = arith.constant 0 : index
      %c0_17 = arith.constant 0 : index
      %21 = vector.load %arg7[%c0_16, %c0_17] : memref<1x4xf32, #tpu.memory_space<vmem>>, vector<1x4xf32>
      tpu.vector_store %arg7[%c0_16, %c0_17], %20 {strides = array<i32>} : memref<1x4xf32, #tpu.memory_space<vmem>>, vector<1x4xf32>,
    } else {
    }
    %c0 = arith.constant 0 : index
    %c0_1 = arith.constant 0 : index
    %3 = vector.load %arg1[%c0, %c0_1] : memref<256x4xf32, #tpu.memory_space<vmem>>, vector<256x4xf32>
    %c0_2 = arith.constant 0 : index
    %c0_3 = arith.constant 0 : index
    %4 = vector.load %arg6[%c0_2, %c0_3] : memref<1x4xf32, #tpu.memory_space<vmem>>, vector<1x4xf32>
    %cst = arith.constant dense<0.000000e+00> : vector<4xf32>
    %5 = vector.multi_reduction <add>, %3, %cst [0] : vector<256x4xf32> to vector<4xf32>
    %6 = vector.shape_cast %5 : vector<4xf32> to vector<1x4xf32>
    %7 = arith.addf %4, %6 : vector<1x4xf32>
    %c0_4 = arith.constant 0 : index
    %c0_5 = arith.constant 0 : index
    %8 = vector.load %arg6[%c0_4, %c0_5] : memref<1x4xf32, #tpu.memory_space<vmem>>, vector<1x4xf32>
    tpu.vector_store %arg6[%c0_4, %c0_5], %7 {strides = array<i32>} : memref<1x4xf32, #tpu.memory_space<vmem>>, vector<1x4xf32>,
    %c0_6 = arith.constant 0 : index
    %c0_7 = arith.constant 0 : index
    %9 = vector.load %arg7[%c0_6, %c0_7] : memref<1x4xf32, #tpu.memory_space<vmem>>, vector<1x4xf32>
    %10 = arith.mulf %3, %3 : vector<256x4xf32>
    %cst_8 = arith.constant dense<0.000000e+00> : vector<4xf32>
    %11 = vector.multi_reduction <add>, %10, %cst_8 [0] : vector<256x4xf32> to vector<4xf32>
    %12 = vector.shape_cast %11 : vector<4xf32> to vector<1x4xf32>
    %13 = arith.addf %9, %12 : vector<1x4xf32>
    %c0_9 = arith.constant 0 : index
    %c0_10 = arith.constant 0 : index
    %14 = vector.load %arg7[%c0_9, %c0_10] : memref<1x4xf32, #tpu.memory_space<vmem>>, vector<1x4xf32>
    tpu.vector_store %arg7[%c0_9, %c0_10], %13 {strides = array<i32>} : memref<1x4xf32, #tpu.memory_space<vmem>>, vector<1x4xf32>,
    %c1_i32 = arith.constant 1 : i32
    %15 = arith.cmpi eq, %arg0, %c1_i32 : i32
    %16 = arith.extui %15 : i1 to i32
    %c0_i32_11 = arith.constant 0 : i32
    %17 = arith.cmpi ne, %16, %c0_i32_11 : i32
    scf.if %17 {
      %c0_12 = arith.constant 0 : index
      %c0_13 = arith.constant 0 : index
      %18 = vector.load %arg6[%c0_12, %c0_13] : memref<1x4xf32, #tpu.memory_space<vmem>>, vector<1x4xf32>
      %cst_14 = arith.constant 0.001953125 : f32
      %19 = vector.broadcast %cst_14 : f32 to vector<1x4xf32>
      %20 = arith.mulf %18, %19 : vector<1x4xf32>
      %c0_15 = arith.constant 0 : index
      %c0_16 = arith.constant 0 : index
      %21 = vector.load %arg7[%c0_15, %c0_16] : memref<1x4xf32, #tpu.memory_space<vmem>>, vector<1x4xf32>
      %cst_17 = arith.constant 0.001953125 : f32
      %22 = vector.broadcast %cst_17 : f32 to vector<1x4xf32>
      %23 = arith.mulf %21, %22 : vector<1x4xf32>
      %24 = arith.mulf %20, %20 : vector<1x4xf32>
      %25 = arith.subf %23, %24 : vector<1x4xf32>
      %c0_18 = arith.constant 0 : index
      %c0_19 = arith.constant 0 : index
      %26 = vector.load %arg2[%c0_18, %c0_19] : memref<1x4xf32, #tpu.memory_space<vmem>>, vector<1x4xf32>
      %cst_20 = arith.constant 9.99999974E-6 : f32
      %27 = vector.broadcast %cst_20 : f32 to vector<1x4xf32>
      %28 = arith.addf %25, %27 : vector<1x4xf32>
      %29 = math.rsqrt %28 : vector<1x4xf32>
      %30 = arith.mulf %26, %29 : vector<1x4xf32>
      %c0_21 = arith.constant 0 : index
      %c0_22 = arith.constant 0 : index
      %31 = vector.load %arg4[%c0_21, %c0_22] : memref<1x4xf32, #tpu.memory_space<vmem>>, vector<1x4xf32>
      tpu.vector_store %arg4[%c0_21, %c0_22], %30 {strides = array<i32>} : memref<1x4xf32, #tpu.memory_space<vmem>>, vector<1x4xf32>,
      %c0_23 = arith.constant 0 : index
      %c0_24 = arith.constant 0 : index
      %32 = vector.load %arg3[%c0_23, %c0_24] : memref<1x4xf32, #tpu.memory_space<vmem>>, vector<1x4xf32>
      %33 = arith.mulf %20, %30 : vector<1x4xf32>
      %34 = arith.subf %32, %33 : vector<1x4xf32>
      %c0_25 = arith.constant 0 : index
      %c0_26 = arith.constant 0 : index
      %35 = vector.load %arg5[%c0_25, %c0_26] : memref<1x4xf32, #tpu.memory_space<vmem>>, vector<1x4xf32>
      tpu.vector_store %arg5[%c0_25, %c0_26], %34 {strides = array<i32>} : memref<1x4xf32, #tpu.memory_space<vmem>>, vector<1x4xf32>,
    } else {
    }
    return
  }
  func.func @transform_0(%arg0: i32) -> (i32, i32) {
    %c0_i32 = arith.constant 0 : i32
    %c0_i32_0 = arith.constant 0 : i32
    return %arg0, %c0_i32 : i32, i32
  }
  func.func @transform_1(%arg0: i32) -> (i32, i32) {
    %c0_i32 = arith.constant 0 : i32
    %c0_i32_0 = arith.constant 0 : i32
    %c0_i32_1 = arith.constant 0 : i32
    return %c0_i32, %c0_i32_0 : i32, i32
  }
  func.func @transform_2(%arg0: i32) -> (i32, i32) {
    %c0_i32 = arith.constant 0 : i32
    %c0_i32_0 = arith.constant 0 : i32
    %c0_i32_1 = arith.constant 0 : i32
    return %c0_i32, %c0_i32_0 : i32, i32
  }
  func.func @transform_3(%arg0: i32) -> (i32, i32) {
    %c0_i32 = arith.constant 0 : i32
    %c0_i32_0 = arith.constant 0 : i32
    %c0_i32_1 = arith.constant 0 : i32
    return %c0_i32, %c0_i32_0 : i32, i32
  }
  func.func @transform_4(%arg0: i32) -> (i32, i32) {
    %c0_i32 = arith.constant 0 : i32
    %c0_i32_0 = arith.constant 0 : i32
    %c0_i32_1 = arith.constant 0 : i32
    return %c0_i32, %c0_i32_0 : i32, i32
  }
}

module attributes {stable_mosaic.version = 11 : i64} {
  func.func @_bn_stats_kernel(%arg0: i32, %arg1: memref<128x8xf32, #tpu.memory_space<vmem>>, %arg2: memref<1x8xf32, #tpu.memory_space<vmem>>, %arg3: memref<1x8xf32, #tpu.memory_space<vmem>>, %arg4: memref<1x8xf32, #tpu.memory_space<vmem>>, %arg5: memref<1x8xf32, #tpu.memory_space<vmem>>, %arg6: memref<1x8xf32, #tpu.memory_space<vmem>>, %arg7: memref<1x8xf32, #tpu.memory_space<vmem>>) attributes {dimension_semantics = [#tpu.dimension_semantics<arbitrary>], iteration_bounds = array<i64: 1>, scalar_prefetch = 0 : i64, scratch_operands = 2 : i64, tpu.core_type = #tpu.core_type<tc>, window_params = [{transform_indices = @transform_0, window_bounds = array<i64: 128, 8>}, {pipeline_mode = #tpu.pipeline_mode<synchronous>, transform_indices = @transform_1, window_bounds = array<i64: 1, 8>}, {pipeline_mode = #tpu.pipeline_mode<synchronous>, transform_indices = @transform_2, window_bounds = array<i64: 1, 8>}, {pipeline_mode = #tpu.pipeline_mode<synchronous>, transform_indices = @transform_3, window_bounds = array<i64: 1, 8>}, {pipeline_mode = #tpu.pipeline_mode<synchronous>, transform_indices = @transform_4, window_bounds = array<i64: 1, 8>}]} {
    %c0_i32 = arith.constant 0 : i32
    %0 = arith.cmpi eq, %arg0, %c0_i32 : i32
    %1 = arith.extui %0 : i1 to i32
    %c0_i32_0 = arith.constant 0 : i32
    %2 = arith.cmpi ne, %1, %c0_i32_0 : i32
    scf.if %2 {
      %cst_13 = arith.constant 0.000000e+00 : f32
      %18 = vector.broadcast %cst_13 : f32 to vector<1x8xf32>
      %c0_14 = arith.constant 0 : index
      %c0_15 = arith.constant 0 : index
      %19 = vector.load %arg6[%c0_14, %c0_15] : memref<1x8xf32, #tpu.memory_space<vmem>>, vector<1x8xf32>
      tpu.vector_store %arg6[%c0_14, %c0_15], %18 {strides = array<i32>} : memref<1x8xf32, #tpu.memory_space<vmem>>, vector<1x8xf32>,
      %cst_16 = arith.constant 0.000000e+00 : f32
      %20 = vector.broadcast %cst_16 : f32 to vector<1x8xf32>
      %c0_17 = arith.constant 0 : index
      %c0_18 = arith.constant 0 : index
      %21 = vector.load %arg7[%c0_17, %c0_18] : memref<1x8xf32, #tpu.memory_space<vmem>>, vector<1x8xf32>
      tpu.vector_store %arg7[%c0_17, %c0_18], %20 {strides = array<i32>} : memref<1x8xf32, #tpu.memory_space<vmem>>, vector<1x8xf32>,
    } else {
    }
    %c0 = arith.constant 0 : index
    %c0_1 = arith.constant 0 : index
    %3 = vector.load %arg1[%c0, %c0_1] : memref<128x8xf32, #tpu.memory_space<vmem>>, vector<128x8xf32>
    %c0_2 = arith.constant 0 : index
    %c0_3 = arith.constant 0 : index
    %4 = vector.load %arg6[%c0_2, %c0_3] : memref<1x8xf32, #tpu.memory_space<vmem>>, vector<1x8xf32>
    %cst = arith.constant dense<0.000000e+00> : vector<8xf32>
    %5 = vector.multi_reduction <add>, %3, %cst [0] : vector<128x8xf32> to vector<8xf32>
    %6 = vector.shape_cast %5 : vector<8xf32> to vector<1x8xf32>
    %7 = arith.addf %4, %6 : vector<1x8xf32>
    %c0_4 = arith.constant 0 : index
    %c0_5 = arith.constant 0 : index
    %8 = vector.load %arg6[%c0_4, %c0_5] : memref<1x8xf32, #tpu.memory_space<vmem>>, vector<1x8xf32>
    tpu.vector_store %arg6[%c0_4, %c0_5], %7 {strides = array<i32>} : memref<1x8xf32, #tpu.memory_space<vmem>>, vector<1x8xf32>,
    %c0_6 = arith.constant 0 : index
    %c0_7 = arith.constant 0 : index
    %9 = vector.load %arg7[%c0_6, %c0_7] : memref<1x8xf32, #tpu.memory_space<vmem>>, vector<1x8xf32>
    %10 = arith.mulf %3, %3 : vector<128x8xf32>
    %cst_8 = arith.constant dense<0.000000e+00> : vector<8xf32>
    %11 = vector.multi_reduction <add>, %10, %cst_8 [0] : vector<128x8xf32> to vector<8xf32>
    %12 = vector.shape_cast %11 : vector<8xf32> to vector<1x8xf32>
    %13 = arith.addf %9, %12 : vector<1x8xf32>
    %c0_9 = arith.constant 0 : index
    %c0_10 = arith.constant 0 : index
    %14 = vector.load %arg7[%c0_9, %c0_10] : memref<1x8xf32, #tpu.memory_space<vmem>>, vector<1x8xf32>
    tpu.vector_store %arg7[%c0_9, %c0_10], %13 {strides = array<i32>} : memref<1x8xf32, #tpu.memory_space<vmem>>, vector<1x8xf32>,
    %c0_i32_11 = arith.constant 0 : i32
    %15 = arith.cmpi eq, %arg0, %c0_i32_11 : i32
    %16 = arith.extui %15 : i1 to i32
    %c0_i32_12 = arith.constant 0 : i32
    %17 = arith.cmpi ne, %16, %c0_i32_12 : i32
    scf.if %17 {
      %c0_13 = arith.constant 0 : index
      %c0_14 = arith.constant 0 : index
      %18 = vector.load %arg6[%c0_13, %c0_14] : memref<1x8xf32, #tpu.memory_space<vmem>>, vector<1x8xf32>
      %cst_15 = arith.constant 7.812500e-03 : f32
      %19 = vector.broadcast %cst_15 : f32 to vector<1x8xf32>
      %20 = arith.mulf %18, %19 : vector<1x8xf32>
      %c0_16 = arith.constant 0 : index
      %c0_17 = arith.constant 0 : index
      %21 = vector.load %arg7[%c0_16, %c0_17] : memref<1x8xf32, #tpu.memory_space<vmem>>, vector<1x8xf32>
      %cst_18 = arith.constant 7.812500e-03 : f32
      %22 = vector.broadcast %cst_18 : f32 to vector<1x8xf32>
      %23 = arith.mulf %21, %22 : vector<1x8xf32>
      %24 = arith.mulf %20, %20 : vector<1x8xf32>
      %25 = arith.subf %23, %24 : vector<1x8xf32>
      %c0_19 = arith.constant 0 : index
      %c0_20 = arith.constant 0 : index
      %26 = vector.load %arg2[%c0_19, %c0_20] : memref<1x8xf32, #tpu.memory_space<vmem>>, vector<1x8xf32>
      %cst_21 = arith.constant 9.99999974E-6 : f32
      %27 = vector.broadcast %cst_21 : f32 to vector<1x8xf32>
      %28 = arith.addf %25, %27 : vector<1x8xf32>
      %29 = math.rsqrt %28 : vector<1x8xf32>
      %30 = arith.mulf %26, %29 : vector<1x8xf32>
      %c0_22 = arith.constant 0 : index
      %c0_23 = arith.constant 0 : index
      %31 = vector.load %arg4[%c0_22, %c0_23] : memref<1x8xf32, #tpu.memory_space<vmem>>, vector<1x8xf32>
      tpu.vector_store %arg4[%c0_22, %c0_23], %30 {strides = array<i32>} : memref<1x8xf32, #tpu.memory_space<vmem>>, vector<1x8xf32>,
      %c0_24 = arith.constant 0 : index
      %c0_25 = arith.constant 0 : index
      %32 = vector.load %arg3[%c0_24, %c0_25] : memref<1x8xf32, #tpu.memory_space<vmem>>, vector<1x8xf32>
      %33 = arith.mulf %20, %30 : vector<1x8xf32>
      %34 = arith.subf %32, %33 : vector<1x8xf32>
      %c0_26 = arith.constant 0 : index
      %c0_27 = arith.constant 0 : index
      %35 = vector.load %arg5[%c0_26, %c0_27] : memref<1x8xf32, #tpu.memory_space<vmem>>, vector<1x8xf32>
      tpu.vector_store %arg5[%c0_26, %c0_27], %34 {strides = array<i32>} : memref<1x8xf32, #tpu.memory_space<vmem>>, vector<1x8xf32>,
    } else {
    }
    return
  }
  func.func @transform_0(%arg0: i32) -> (i32, i32) {
    %c0_i32 = arith.constant 0 : i32
    %c0_i32_0 = arith.constant 0 : i32
    return %arg0, %c0_i32 : i32, i32
  }
  func.func @transform_1(%arg0: i32) -> (i32, i32) {
    %c0_i32 = arith.constant 0 : i32
    %c0_i32_0 = arith.constant 0 : i32
    %c0_i32_1 = arith.constant 0 : i32
    return %c0_i32, %c0_i32_0 : i32, i32
  }
  func.func @transform_2(%arg0: i32) -> (i32, i32) {
    %c0_i32 = arith.constant 0 : i32
    %c0_i32_0 = arith.constant 0 : i32
    %c0_i32_1 = arith.constant 0 : i32
    return %c0_i32, %c0_i32_0 : i32, i32
  }
  func.func @transform_3(%arg0: i32) -> (i32, i32) {
    %c0_i32 = arith.constant 0 : i32
    %c0_i32_0 = arith.constant 0 : i32
    %c0_i32_1 = arith.constant 0 : i32
    return %c0_i32, %c0_i32_0 : i32, i32
  }
  func.func @transform_4(%arg0: i32) -> (i32, i32) {
    %c0_i32 = arith.constant 0 : i32
    %c0_i32_0 = arith.constant 0 : i32
    %c0_i32_1 = arith.constant 0 : i32
    return %c0_i32, %c0_i32_0 : i32, i32
  }
}

module attributes {stable_mosaic.version = 11 : i64} {
  func.func @_fused_bn_matmul_kernel(%arg0: i32, %arg1: i32, %arg2: i32, %arg3: memref<128x128xf32, #tpu.memory_space<vmem>>, %arg4: memref<1x128xf32, #tpu.memory_space<vmem>>, %arg5: memref<1x128xf32, #tpu.memory_space<vmem>>, %arg6: memref<128x128xbf16, #tpu.memory_space<vmem>>, %arg7: memref<1x128xf32, #tpu.memory_space<vmem>>, %arg8: memref<128x128xf32, #tpu.memory_space<vmem>>, %arg9: memref<128x128xf32, #tpu.memory_space<vmem>>) attributes {dimension_semantics = [#tpu.dimension_semantics<parallel>, #tpu.dimension_semantics<parallel>, #tpu.dimension_semantics<arbitrary>], iteration_bounds = array<i64: 1, 1, 1>, scalar_prefetch = 0 : i64, scratch_operands = 1 : i64, tpu.core_type = #tpu.core_type<tc>, window_params = [{transform_indices = @transform_0, window_bounds = array<i64: 128, 128>}, {transform_indices = @transform_1, window_bounds = array<i64: 1, 128>}, {transform_indices = @transform_2, window_bounds = array<i64: 1, 128>}, {transform_indices = @transform_3, window_bounds = array<i64: 128, 128>}, {transform_indices = @transform_4, window_bounds = array<i64: 1, 128>}, {transform_indices = @transform_5, window_bounds = array<i64: 128, 128>}]} {
    %c0_i32 = arith.constant 0 : i32
    %0 = arith.cmpi eq, %arg2, %c0_i32 : i32
    %1 = arith.extui %0 : i1 to i32
    %c0_i32_0 = arith.constant 0 : i32
    %2 = arith.cmpi ne, %1, %c0_i32_0 : i32
    scf.if %2 {
      %cst_16 = arith.constant 0.000000e+00 : f32
      %24 = vector.broadcast %cst_16 : f32 to vector<128x128xf32>
      %c0_17 = arith.constant 0 : index
      %c0_18 = arith.constant 0 : index
      %25 = vector.load %arg9[%c0_17, %c0_18] : memref<128x128xf32, #tpu.memory_space<vmem>>, vector<128x128xf32>
      tpu.vector_store %arg9[%c0_17, %c0_18], %24 {strides = array<i32>} : memref<128x128xf32, #tpu.memory_space<vmem>>, vector<128x128xf32>,
    } else {
    }
    %c0 = arith.constant 0 : index
    %c0_1 = arith.constant 0 : index
    %3 = vector.load %arg3[%c0, %c0_1] : memref<128x128xf32, #tpu.memory_space<vmem>>, vector<128x128xf32>
    %c0_2 = arith.constant 0 : index
    %c0_3 = arith.constant 0 : index
    %4 = vector.load %arg4[%c0_2, %c0_3] : memref<1x128xf32, #tpu.memory_space<vmem>>, vector<1x128xf32>
    %5 = vector.broadcast %4 : vector<1x128xf32> to vector<128x128xf32>
    %6 = arith.mulf %3, %5 : vector<128x128xf32>
    %c0_4 = arith.constant 0 : index
    %c0_5 = arith.constant 0 : index
    %7 = vector.load %arg5[%c0_4, %c0_5] : memref<1x128xf32, #tpu.memory_space<vmem>>, vector<1x128xf32>
    %8 = vector.broadcast %7 : vector<1x128xf32> to vector<128x128xf32>
    %9 = arith.addf %6, %8 : vector<128x128xf32>
    %cst = arith.constant 0.000000e+00 : f32
    %10 = vector.broadcast %cst : f32 to vector<128x128xf32>
    %11 = arith.cmpf ogt, %9, %10 : vector<128x128xf32>
    %cst_6 = arith.constant 1.000000e-01 : f32
    %12 = vector.broadcast %cst_6 : f32 to vector<128x128xf32>
    %13 = arith.mulf %12, %9 : vector<128x128xf32>
    %14 = arith.select %11, %9, %13 : vector<128x128xi1>, vector<128x128xf32>
    %c0_7 = arith.constant 0 : index
    %c0_8 = arith.constant 0 : index
    %15 = vector.load %arg9[%c0_7, %c0_8] : memref<128x128xf32, #tpu.memory_space<vmem>>, vector<128x128xf32>
    %16 = arith.truncf %14 : vector<128x128xf32> to vector<128x128xbf16>
    %c0_9 = arith.constant 0 : index
    %c0_10 = arith.constant 0 : index
    %17 = vector.load %arg6[%c0_9, %c0_10] : memref<128x128xbf16, #tpu.memory_space<vmem>>, vector<128x128xbf16>
    %cst_11 = arith.constant dense<0.000000e+00> : vector<128x128xf32>
    %18 = tpu.matmul %16, %17, %cst_11 {dimension_numbers = #tpu.dot_dimension_numbers<[1], [0], [0], [1], [0, 0, 1, 1], [], []>} : vector<128x128xbf16>, vector<128x128xbf16>, vector<128x128xf32> -> vector<128x128xf32>
    %19 = arith.addf %15, %18 : vector<128x128xf32>
    %c0_12 = arith.constant 0 : index
    %c0_13 = arith.constant 0 : index
    %20 = vector.load %arg9[%c0_12, %c0_13] : memref<128x128xf32, #tpu.memory_space<vmem>>, vector<128x128xf32>
    tpu.vector_store %arg9[%c0_12, %c0_13], %19 {strides = array<i32>} : memref<128x128xf32, #tpu.memory_space<vmem>>, vector<128x128xf32>,
    %c0_i32_14 = arith.constant 0 : i32
    %21 = arith.cmpi eq, %arg2, %c0_i32_14 : i32
    %22 = arith.extui %21 : i1 to i32
    %c0_i32_15 = arith.constant 0 : i32
    %23 = arith.cmpi ne, %22, %c0_i32_15 : i32
    scf.if %23 {
      %c0_16 = arith.constant 0 : index
      %c0_17 = arith.constant 0 : index
      %24 = vector.load %arg9[%c0_16, %c0_17] : memref<128x128xf32, #tpu.memory_space<vmem>>, vector<128x128xf32>
      %c0_18 = arith.constant 0 : index
      %c0_19 = arith.constant 0 : index
      %25 = vector.load %arg7[%c0_18, %c0_19] : memref<1x128xf32, #tpu.memory_space<vmem>>, vector<1x128xf32>
      %26 = vector.broadcast %25 : vector<1x128xf32> to vector<128x128xf32>
      %27 = arith.addf %24, %26 : vector<128x128xf32>
      %c0_20 = arith.constant 0 : index
      %c0_21 = arith.constant 0 : index
      %28 = vector.load %arg8[%c0_20, %c0_21] : memref<128x128xf32, #tpu.memory_space<vmem>>, vector<128x128xf32>
      tpu.vector_store %arg8[%c0_20, %c0_21], %27 {strides = array<i32>} : memref<128x128xf32, #tpu.memory_space<vmem>>, vector<128x128xf32>,
    } else {
    }
    return
  }
  func.func @transform_0(%arg0: i32, %arg1: i32, %arg2: i32) -> (i32, i32) {
    %c0_i32 = arith.constant 0 : i32
    return %arg0, %arg2 : i32, i32
  }
  func.func @transform_1(%arg0: i32, %arg1: i32, %arg2: i32) -> (i32, i32) {
    %c0_i32 = arith.constant 0 : i32
    %c0_i32_0 = arith.constant 0 : i32
    return %c0_i32, %arg2 : i32, i32
  }
  func.func @transform_2(%arg0: i32, %arg1: i32, %arg2: i32) -> (i32, i32) {
    %c0_i32 = arith.constant 0 : i32
    %c0_i32_0 = arith.constant 0 : i32
    return %c0_i32, %arg2 : i32, i32
  }
  func.func @transform_3(%arg0: i32, %arg1: i32, %arg2: i32) -> (i32, i32) {
    %c0_i32 = arith.constant 0 : i32
    return %arg2, %arg1 : i32, i32
  }
  func.func @transform_4(%arg0: i32, %arg1: i32, %arg2: i32) -> (i32, i32) {
    %c0_i32 = arith.constant 0 : i32
    %c0_i32_0 = arith.constant 0 : i32
    return %c0_i32, %arg1 : i32, i32
  }
  func.func @transform_5(%arg0: i32, %arg1: i32, %arg2: i32) -> (i32, i32) {
    %c0_i32 = arith.constant 0 : i32
    return %arg0, %arg1 : i32, i32
  }
}

module attributes {stable_mosaic.version = 11 : i64} {
  func.func @_fused_bn_matmul_kernel(%arg0: i32, %arg1: i32, %arg2: i32, %arg3: memref<128x128xf32, #tpu.memory_space<vmem>>, %arg4: memref<1x128xf32, #tpu.memory_space<vmem>>, %arg5: memref<1x128xf32, #tpu.memory_space<vmem>>, %arg6: memref<128x128xbf16, #tpu.memory_space<vmem>>, %arg7: memref<1x128xf32, #tpu.memory_space<vmem>>, %arg8: memref<128x128xf32, #tpu.memory_space<vmem>>, %arg9: memref<128x128xf32, #tpu.memory_space<vmem>>, %arg10: memref<128x128xf32, #tpu.memory_space<vmem>>) attributes {dimension_semantics = [#tpu.dimension_semantics<parallel>, #tpu.dimension_semantics<parallel>, #tpu.dimension_semantics<arbitrary>], iteration_bounds = array<i64: 1, 1, 1>, scalar_prefetch = 0 : i64, scratch_operands = 1 : i64, tpu.core_type = #tpu.core_type<tc>, window_params = [{transform_indices = @transform_0, window_bounds = array<i64: 128, 128>}, {transform_indices = @transform_1, window_bounds = array<i64: 1, 128>}, {transform_indices = @transform_2, window_bounds = array<i64: 1, 128>}, {transform_indices = @transform_3, window_bounds = array<i64: 128, 128>}, {transform_indices = @transform_4, window_bounds = array<i64: 1, 128>}, {transform_indices = @transform_5, window_bounds = array<i64: 128, 128>}, {transform_indices = @transform_6, window_bounds = array<i64: 128, 128>}]} {
    %c0_i32 = arith.constant 0 : i32
    %0 = arith.cmpi eq, %arg2, %c0_i32 : i32
    %1 = arith.extui %0 : i1 to i32
    %c0_i32_0 = arith.constant 0 : i32
    %2 = arith.cmpi ne, %1, %c0_i32_0 : i32
    scf.if %2 {
      %cst_16 = arith.constant 0.000000e+00 : f32
      %24 = vector.broadcast %cst_16 : f32 to vector<128x128xf32>
      %c0_17 = arith.constant 0 : index
      %c0_18 = arith.constant 0 : index
      %25 = vector.load %arg10[%c0_17, %c0_18] : memref<128x128xf32, #tpu.memory_space<vmem>>, vector<128x128xf32>
      tpu.vector_store %arg10[%c0_17, %c0_18], %24 {strides = array<i32>} : memref<128x128xf32, #tpu.memory_space<vmem>>, vector<128x128xf32>,
    } else {
    }
    %c0 = arith.constant 0 : index
    %c0_1 = arith.constant 0 : index
    %3 = vector.load %arg3[%c0, %c0_1] : memref<128x128xf32, #tpu.memory_space<vmem>>, vector<128x128xf32>
    %c0_2 = arith.constant 0 : index
    %c0_3 = arith.constant 0 : index
    %4 = vector.load %arg4[%c0_2, %c0_3] : memref<1x128xf32, #tpu.memory_space<vmem>>, vector<1x128xf32>
    %5 = vector.broadcast %4 : vector<1x128xf32> to vector<128x128xf32>
    %6 = arith.mulf %3, %5 : vector<128x128xf32>
    %c0_4 = arith.constant 0 : index
    %c0_5 = arith.constant 0 : index
    %7 = vector.load %arg5[%c0_4, %c0_5] : memref<1x128xf32, #tpu.memory_space<vmem>>, vector<1x128xf32>
    %8 = vector.broadcast %7 : vector<1x128xf32> to vector<128x128xf32>
    %9 = arith.addf %6, %8 : vector<128x128xf32>
    %cst = arith.constant 0.000000e+00 : f32
    %10 = vector.broadcast %cst : f32 to vector<128x128xf32>
    %11 = arith.cmpf ogt, %9, %10 : vector<128x128xf32>
    %cst_6 = arith.constant 1.000000e-01 : f32
    %12 = vector.broadcast %cst_6 : f32 to vector<128x128xf32>
    %13 = arith.mulf %12, %9 : vector<128x128xf32>
    %14 = arith.select %11, %9, %13 : vector<128x128xi1>, vector<128x128xf32>
    %c0_7 = arith.constant 0 : index
    %c0_8 = arith.constant 0 : index
    %15 = vector.load %arg10[%c0_7, %c0_8] : memref<128x128xf32, #tpu.memory_space<vmem>>, vector<128x128xf32>
    %16 = arith.truncf %14 : vector<128x128xf32> to vector<128x128xbf16>
    %c0_9 = arith.constant 0 : index
    %c0_10 = arith.constant 0 : index
    %17 = vector.load %arg6[%c0_9, %c0_10] : memref<128x128xbf16, #tpu.memory_space<vmem>>, vector<128x128xbf16>
    %cst_11 = arith.constant dense<0.000000e+00> : vector<128x128xf32>
    %18 = tpu.matmul %16, %17, %cst_11 {dimension_numbers = #tpu.dot_dimension_numbers<[1], [0], [0], [1], [0, 0, 1, 1], [], []>} : vector<128x128xbf16>, vector<128x128xbf16>, vector<128x128xf32> -> vector<128x128xf32>
    %19 = arith.addf %15, %18 : vector<128x128xf32>
    %c0_12 = arith.constant 0 : index
    %c0_13 = arith.constant 0 : index
    %20 = vector.load %arg10[%c0_12, %c0_13] : memref<128x128xf32, #tpu.memory_space<vmem>>, vector<128x128xf32>
    tpu.vector_store %arg10[%c0_12, %c0_13], %19 {strides = array<i32>} : memref<128x128xf32, #tpu.memory_space<vmem>>, vector<128x128xf32>,
    %c0_i32_14 = arith.constant 0 : i32
    %21 = arith.cmpi eq, %arg2, %c0_i32_14 : i32
    %22 = arith.extui %21 : i1 to i32
    %c0_i32_15 = arith.constant 0 : i32
    %23 = arith.cmpi ne, %22, %c0_i32_15 : i32
    scf.if %23 {
      %c0_16 = arith.constant 0 : index
      %c0_17 = arith.constant 0 : index
      %24 = vector.load %arg10[%c0_16, %c0_17] : memref<128x128xf32, #tpu.memory_space<vmem>>, vector<128x128xf32>
      %c0_18 = arith.constant 0 : index
      %c0_19 = arith.constant 0 : index
      %25 = vector.load %arg7[%c0_18, %c0_19] : memref<1x128xf32, #tpu.memory_space<vmem>>, vector<1x128xf32>
      %26 = vector.broadcast %25 : vector<1x128xf32> to vector<128x128xf32>
      %27 = arith.addf %24, %26 : vector<128x128xf32>
      %c0_20 = arith.constant 0 : index
      %c0_21 = arith.constant 0 : index
      %28 = vector.load %arg8[%c0_20, %c0_21] : memref<128x128xf32, #tpu.memory_space<vmem>>, vector<128x128xf32>
      %29 = arith.addf %27, %28 : vector<128x128xf32>
      %c0_22 = arith.constant 0 : index
      %c0_23 = arith.constant 0 : index
      %30 = vector.load %arg9[%c0_22, %c0_23] : memref<128x128xf32, #tpu.memory_space<vmem>>, vector<128x128xf32>
      tpu.vector_store %arg9[%c0_22, %c0_23], %29 {strides = array<i32>} : memref<128x128xf32, #tpu.memory_space<vmem>>, vector<128x128xf32>,
    } else {
    }
    return
  }
  func.func @transform_0(%arg0: i32, %arg1: i32, %arg2: i32) -> (i32, i32) {
    %c0_i32 = arith.constant 0 : i32
    return %arg0, %arg2 : i32, i32
  }
  func.func @transform_1(%arg0: i32, %arg1: i32, %arg2: i32) -> (i32, i32) {
    %c0_i32 = arith.constant 0 : i32
    %c0_i32_0 = arith.constant 0 : i32
    return %c0_i32, %arg2 : i32, i32
  }
  func.func @transform_2(%arg0: i32, %arg1: i32, %arg2: i32) -> (i32, i32) {
    %c0_i32 = arith.constant 0 : i32
    %c0_i32_0 = arith.constant 0 : i32
    return %c0_i32, %arg2 : i32, i32
  }
  func.func @transform_3(%arg0: i32, %arg1: i32, %arg2: i32) -> (i32, i32) {
    %c0_i32 = arith.constant 0 : i32
    return %arg2, %arg1 : i32, i32
  }
  func.func @transform_4(%arg0: i32, %arg1: i32, %arg2: i32) -> (i32, i32) {
    %c0_i32 = arith.constant 0 : i32
    %c0_i32_0 = arith.constant 0 : i32
    return %c0_i32, %arg1 : i32, i32
  }
  func.func @transform_5(%arg0: i32, %arg1: i32, %arg2: i32) -> (i32, i32) {
    %c0_i32 = arith.constant 0 : i32
    return %arg0, %arg1 : i32, i32
  }
  func.func @transform_6(%arg0: i32, %arg1: i32, %arg2: i32) -> (i32, i32) {
    %c0_i32 = arith.constant 0 : i32
    return %arg0, %arg1 : i32, i32
  }
}

</mosaic_0001>

<llo_original>
// kernel: transition_block_forward.5
$region0: #{transition_block_forward.5}
  #allocation0 [shape = 'u32[]', space=smem, size = 0x4, offset = 0x4, fixed_abs, tag = 'smem constant byte address 0x4 - core index']
  #allocation1 [shape = 'u32[144,128]{1,0:T(1,128)}', space=vmem, size = 0x12000, scoped, tag = 'internal scratch']
  #allocation2 [shape = 'f32[1,4]{1,0:T(1,128)}', space=vmem, size = 0x200, scoped, tag = 'scratch operand']
  #allocation3 [shape = 'f32[1,4]{1,0:T(1,128)}', space=vmem, size = 0x200, scoped, tag = 'scratch operand']
  %s0 = inlined_call_operand.vmem [shape: f32[512,4], index: 0, kind: input, shape index: {}]
  %s1 = inlined_call_operand.vmem [shape: f32[1,4], index: 1, kind: input, shape index: {}]
  %s2 = inlined_call_operand.vmem [shape: f32[1,4], index: 2, kind: input, shape index: {}]
  %s3 = inlined_call_operand.vmem [shape: f32[1,4], index: 3, kind: output, shape index: {0}]
  %s4 = inlined_call_operand.vmem [shape: f32[1,4], index: 4, kind: output, shape index: {1}]
  %5 = xla_tuple %s3, %s4
  %s6 = sld [smem:[#allocation0]]
  $region61: #{transition_block_forward.5} parent=0
    _
  %s8 = ssub.s32 1, %s6
  %s9 = scalar_select 0, %s8, %s6
  loop: start=0, step=1, limit=4
  $region2: #{transition_block_forward.5} parent=0 // loop_pre_header
    _
  $region3: #{transition_block_forward.5} parent=0 // loop_header
    %s11 = sphi 0, %s15
    %p12 = scmp.ge.s32.totalorder %s11, 4
    %s21 = sphi 0, %s23
    %s24 = sphi 0, %s21
    %s25 = sphi 0, %s24
    %s41 = sphi 0, %s25
    %s45 = sphi 0, %s45
    %s47 = sphi 0, %s45
    %s48 = sphi 0, %s47
    %s62 = sphi 0, %s48
    %s66 = sphi 0, %s66
    %s68 = sphi 0, %s66
    %s69 = sphi 0, %s68
    %s83 = sphi 0, %s69
    %s87 = sphi 0, %s87
    %s89 = sphi 0, %s87
    %s90 = sphi 0, %s89
    %s104 = sphi 0, %s90
    %s108 = sphi 0, %s108
    %s110 = sphi 0, %s108
    %s111 = sphi 0, %s110
    %s125 = sphi 0, %s111
  $region4: #{transition_block_forward.5} parent=0 // loop_header_branch
    %14 = sbr.rel (%p12) target = $region8
  $region5: #{transition_block_forward.5} parent=0 // loop_body
    %s16 = ssub.s32 %s11, 1
    %s17 = ssub.s32 %s11, 2
    %s18 = sadd.s32 %s11, 1
    %s19 = ssub.s32 %s11, %s18
    %p20 = scmp.eq.s32.totalorder %s19, 0
    %s22 = sadd.s32 %s21, 1
    %s23 = scalar_select %p20, %s21, %s22
    %p26 = pneg %p20
    %p27 = scmp.eq.s32.totalorder %s11, 1
    %p28 = por %p26, %p27
    %p29 = scmp.ne.s32.totalorder %s21, %s24
    %p30 = scmp.eq.s32.totalorder %s11, 0
    %p31 = por %p29, %p30
    %p32 = scmp.ne.s32.totalorder %s21, %s24
    %p33 = scmp.eq.s32.totalorder %s16, 1
    %p34 = por %p32, %p33
    %p35 = scmp.ne.s32.totalorder %s24, %s25
    %p36 = scmp.eq.s32.totalorder %s16, 0
    %p37 = por %p35, %p36
    %p38 = scmp.ne.s32.totalorder %s24, %s25
    %p39 = scmp.eq.s32.totalorder %s17, 1
    %p40 = por %p38, %p39
    %p42 = scmp.ne.s32.totalorder %s25, %s41
    %p43 = scmp.eq.s32.totalorder %s17, 0
    %p44 = por %p42, %p43
    %s46 = sadd.s32 %s45, 1
    %p49 = scmp.eq.s32.totalorder %s11, 1
    %p50 = scmp.ne.s32.totalorder %s45, %s47
    %p51 = scmp.eq.s32.totalorder %s11, 0
    %p52 = por %p50, %p51
    %p53 = scmp.ne.s32.totalorder %s45, %s47
    %p54 = scmp.eq.s32.totalorder %s16, 1
    %p55 = por %p53, %p54
    %p56 = scmp.ne.s32.totalorder %s47, %s48
    %p57 = scmp.eq.s32.totalorder %s16, 0
    %p58 = por %p56, %p57
    %p59 = scmp.ne.s32.totalorder %s47, %s48
    %p60 = scmp.eq.s32.totalorder %s17, 1
    %p61 = por %p59, %p60
    %p63 = scmp.ne.s32.totalorder %s48, %s62
    %p64 = scmp.eq.s32.totalorder %s17, 0
    %p65 = por %p63, %p64
    %s67 = sadd.s32 %s66, 1
    %p70 = scmp.eq.s32.totalorder %s11, 1
    %p71 = scmp.ne.s32.totalorder %s66, %s68
    %p72 = scmp.eq.s32.totalorder %s11, 0
    %p73 = por %p71, %p72
    %p74 = scmp.ne.s32.totalorder %s66, %s68
    %p75 = scmp.eq.s32.totalorder %s16, 1
    %p76 = por %p74, %p75
    %p77 = scmp.ne.s32.totalorder %s68, %s69
    %p78 = scmp.eq.s32.totalorder %s16, 0
    %p79 = por %p77, %p78
    %p80 = scmp.ne.s32.totalorder %s68, %s69
    %p81 = scmp.eq.s32.totalorder %s17, 1
    %p82 = por %p80, %p81
    %p84 = scmp.ne.s32.totalorder %s69, %s83
    %p85 = scmp.eq.s32.totalorder %s17, 0
    %p86 = por %p84, %p85
    %s88 = sadd.s32 %s87, 1
    %p91 = scmp.eq.s32.totalorder %s11, 1
    %p92 = scmp.ne.s32.totalorder %s87, %s89
    %p93 = scmp.eq.s32.totalorder %s11, 0
    %p94 = por %p92, %p93
    %p95 = scmp.ne.s32.totalorder %s87, %s89
    %p96 = scmp.eq.s32.totalorder %s16, 1
    %p97 = por %p95, %p96
    %p98 = scmp.ne.s32.totalorder %s89, %s90
    %p99 = scmp.eq.s32.totalorder %s16, 0
    %p100 = por %p98, %p99
    %p101 = scmp.ne.s32.totalorder %s89, %s90
    %p102 = scmp.eq.s32.totalorder %s17, 1
    %p103 = por %p101, %p102
    %p105 = scmp.ne.s32.totalorder %s90, %s104
    %p106 = scmp.eq.s32.totalorder %s17, 0
    %p107 = por %p105, %p106
    %s109 = sadd.s32 %s108, 1
    %p112 = scmp.eq.s32.totalorder %s11, 1
    %p113 = scmp.ne.s32.totalorder %s108, %s110
    %p114 = scmp.eq.s32.totalorder %s11, 0
    %p115 = por %p113, %p114
    %p116 = scmp.ne.s32.totalorder %s108, %s110
    %p117 = scmp.eq.s32.totalorder %s16, 1
    %p118 = por %p116, %p117
    %p119 = scmp.ne.s32.totalorder %s110, %s111
    %p120 = scmp.eq.s32.totalorder %s16, 0
    %p121 = por %p119, %p120
    %p122 = scmp.ne.s32.totalorder %s110, %s111
    %p123 = scmp.eq.s32.totalorder %s17, 1
    %p124 = por %p122, %p123
    %p126 = scmp.ne.s32.totalorder %s111, %s125
    %p127 = scmp.eq.s32.totalorder %s17, 0
    %p128 = por %p126, %p127
    %p129 = scmp.le.s32.totalorder 1, %s11
    %p130 = scmp.lt.s32.totalorder %s11, 3
    %p131 = pnand %p129, %p130
    %p132 = pneg %p131
    // Predicated region
    $region9: #{transition_block_forward.5} parent=5 // pred_check
      _
    $region10: #{transition_block_forward.5} parent=5 // pred_check_branch
      %134 = sbr.rel (%p131) target = $region12
    $region11: #{transition_block_forward.5} parent=5 // pred_region
      %s135 = ssub.s32 %s11, 1
      // Predicated region
      $region13: #{transition_block_forward.5} parent=11 // pred_check
        %p136 = pneg %p58
      $region14: #{transition_block_forward.5} parent=11 // pred_check_branch
        %138 = sbr.rel (%p136) target = $region16
      $region15: #{transition_block_forward.5} parent=11 // pred_region
        _
      $region16: #{transition_block_forward.5} parent=11 // pred_fallthru
        _
      // Predicated region
      $region17: #{transition_block_forward.5} parent=11 // pred_check
        %p139 = pneg %p79
      $region18: #{transition_block_forward.5} parent=11 // pred_check_branch
        %141 = sbr.rel (%p139) target = $region20
      $region19: #{transition_block_forward.5} parent=11 // pred_region
        _
      $region20: #{transition_block_forward.5} parent=11 // pred_fallthru
        _
    $region12: #{transition_block_forward.5} parent=5 // pred_fallthru
      _
    %p142 = scmp.lt.s32.totalorder %s11, 2
    // Predicated region
    $region21: #{transition_block_forward.5} parent=5 // pred_check
      %p143 = pneg %p142
    $region22: #{transition_block_forward.5} parent=5 // pred_check_branch
      %145 = sbr.rel (%p143) target = $region24
    $region23: #{transition_block_forward.5} parent=5 // pred_region
      // Predicated region
      $region25: #{transition_block_forward.5} parent=23 // pred_check
        %p146 = pneg %p31
      $region26: #{transition_block_forward.5} parent=23 // pred_check_branch
        %148 = sbr.rel (%p146) target = $region28
      $region27: #{transition_block_forward.5} parent=23 // pred_region
        %s149 = smul.u32 32, %s11
        %p150 = scmp.lt.s32.totalorder %s149, 63
        %s151 = scalar_select %p150, %s149, 63
        %s152 = smul.addr %s151, 8
        %s153 = scalar_lea.vmem %s0, %s152
        %s154 = smul.u32 32, %s11
      $region28: #{transition_block_forward.5} parent=23 // pred_fallthru
        _
    $region24: #{transition_block_forward.5} parent=5 // pred_fallthru
      _
    %p155 = scmp.le.s32.totalorder 1, %s11
    %p156 = scmp.lt.s32.totalorder %s11, 3
    %p157 = pnand %p155, %p156
    %p158 = pneg %p157
    // Predicated region
    $region29: #{transition_block_forward.5} parent=5 // pred_check
      _
    $region30: #{transition_block_forward.5} parent=5 // pred_check_branch
      %160 = sbr.rel (%p157) target = $region32
    $region31: #{transition_block_forward.5} parent=5 // pred_region
      %s161 = ssub.s32 %s11, 1
      %s162 = smul.u32 32, %s16
      %p163 = scmp.lt.s32.totalorder %s162, 63
      %s164 = scalar_select %p163, %s162, 63
      %s165 = smul.addr %s164, 8
      %s166 = scalar_lea.vmem %s0, %s165
      %p167 = pneg %p37
      %p168 = pneg %p34
      %p169 = pneg %p58
      %p170 = pneg %p55
      %p171 = pneg %p79
      %p172 = pneg %p76
      %p173 = pneg %p100
      %p174 = pneg %p97
      %p175 = pneg %p121
      %p176 = pneg %p118
      %s177 = smul.u32 32, %s16
      %p178 = scmp.lt.s32.totalorder %s177, 63
      %s179 = scalar_select %p178, %s177, 63
      %s180 = smul.addr %s179, 8
      %s181 = scalar_lea.vmem %s0, %s180
      %s182 = smul.u32 32, %s16
      %p183 = scmp.eq.s32.totalorder %s16, 0
      // Predicated region
      $region33: #{transition_block_forward.5} parent=31 // pred_check
        %p184 = pneg %p183
      $region34: #{transition_block_forward.5} parent=31 // pred_check_branch
        %186 = sbr.rel (%p184) target = $region36
      $region35: #{transition_block_forward.5} parent=31 // pred_region
        %vm187 = vcmask 24576
        %188 = vst.msk [vmem:[#allocation2] sm:$0x1] %vm187, 0.0
        %189 = vst.msk [vmem:[#allocation3] sm:$0x1] %vm187, 0.0
      $region36: #{transition_block_forward.5} parent=31 // pred_fallthru
        _
      %v190 = vld [vmem:[%s181] sm:$0xff]
      %v191 = vld [vmem:[%s181 + $0x8] sm:$0xff]
      %v192 = vld [vmem:[%s181 + $0x10] sm:$0xff]
      %v193 = vld [vmem:[%s181 + $0x18] sm:$0xff]
      %v194 = vld [vmem:[%s181 + $0x20] sm:$0xff]
      %v195 = vld [vmem:[%s181 + $0x28] sm:$0xff]
      %v196 = vld [vmem:[%s181 + $0x30] sm:$0xff]
      %v197 = vld [vmem:[%s181 + $0x38] sm:$0xff]
      %v198 = vld [vmem:[%s181 + $0x40] sm:$0xff]
      %v199 = vld [vmem:[%s181 + $0x48] sm:$0xff]
      %v200 = vld [vmem:[%s181 + $0x50] sm:$0xff]
      %v201 = vld [vmem:[%s181 + $0x58] sm:$0xff]
      %v202 = vld [vmem:[%s181 + $0x60] sm:$0xff]
      %v203 = vld [vmem:[%s181 + $0x68] sm:$0xff]
      %v204 = vld [vmem:[%s181 + $0x70] sm:$0xff]
      %v205 = vld [vmem:[%s181 + $0x78] sm:$0xff]
      %v206 = vld [vmem:[%s181 + $0x80] sm:$0xff]
      %v207 = vld [vmem:[%s181 + $0x88] sm:$0xff]
      %v208 = vld [vmem:[%s181 + $0x90] sm:$0xff]
      %v209 = vld [vmem:[%s181 + $0x98] sm:$0xff]
      %v210 = vld [vmem:[%s181 + $0xa0] sm:$0xff]
      %v211 = vld [vmem:[%s181 + $0xa8] sm:$0xff]
      %v212 = vld [vmem:[%s181 + $0xb0] sm:$0xff]
      %v213 = vld [vmem:[%s181 + $0xb8] sm:$0xff]
      %v214 = vld [vmem:[%s181 + $0xc0] sm:$0xff]
      %v215 = vld [vmem:[%s181 + $0xc8] sm:$0xff]
      %v216 = vld [vmem:[%s181 + $0xd0] sm:$0xff]
      %v217 = vld [vmem:[%s181 + $0xd8] sm:$0xff]
      %v218 = vld [vmem:[%s181 + $0xe0] sm:$0xff]
      %v219 = vld [vmem:[%s181 + $0xe8] sm:$0xff]
      %v220 = vld [vmem:[%s181 + $0xf0] sm:$0xff]
      %v221 = vld [vmem:[%s181 + $0xf8] sm:$0xff]
      %v222 = vld [vmem:[#allocation2] sm:$0x1]
      %vm223 = vcmask 31744
      %v224 = vsel %vm223, %v190, 0.0
      %v225 = vsel %vm223, %v191, 0.0
      %v226 = vadd.f32 %v224, %v225
      %v227 = vsel %vm223, %v192, 0.0
      %v228 = vadd.f32 %v226, %v227
      %v229 = vsel %vm223, %v193, 0.0
      %v230 = vadd.f32 %v228, %v229
      %v231 = vsel %vm223, %v194, 0.0
      %v232 = vadd.f32 %v230, %v231
      %v233 = vsel %vm223, %v195, 0.0
      %v234 = vadd.f32 %v232, %v233
      %v235 = vsel %vm223, %v196, 0.0
      %v236 = vadd.f32 %v234, %v235
      %v237 = vsel %vm223, %v197, 0.0
      %v238 = vadd.f32 %v236, %v237
      %v239 = vsel %vm223, %v198, 0.0
      %v240 = vadd.f32 %v238, %v239
      %v241 = vsel %vm223, %v199, 0.0
      %v242 = vadd.f32 %v240, %v241
      %v243 = vsel %vm223, %v200, 0.0
      %v244 = vadd.f32 %v242, %v243
      %v245 = vsel %vm223, %v201, 0.0
      %v246 = vadd.f32 %v244, %v245
      %v247 = vsel %vm223, %v202, 0.0
      %v248 = vadd.f32 %v246, %v247
      %v249 = vsel %vm223, %v203, 0.0
      %v250 = vadd.f32 %v248, %v249
      %v251 = vsel %vm223, %v204, 0.0
      %v252 = vadd.f32 %v250, %v251
      %v253 = vsel %vm223, %v205, 0.0
      %v254 = vadd.f32 %v252, %v253
      %v255 = vsel %vm223, %v206, 0.0
      %v256 = vadd.f32 %v254, %v255
      %v257 = vsel %vm223, %v207, 0.0
      %v258 = vadd.f32 %v256, %v257
      %v259 = vsel %vm223, %v208, 0.0
      %v260 = vadd.f32 %v258, %v259
      %v261 = vsel %vm223, %v209, 0.0
      %v262 = vadd.f32 %v260, %v261
      %v263 = vsel %vm223, %v210, 0.0
      %v264 = vadd.f32 %v262, %v263
      %v265 = vsel %vm223, %v211, 0.0
      %v266 = vadd.f32 %v264, %v265
      %v267 = vsel %vm223, %v212, 0.0
      %v268 = vadd.f32 %v266, %v267
      %v269 = vsel %vm223, %v213, 0.0
      %v270 = vadd.f32 %v268, %v269
      %v271 = vsel %vm223, %v214, 0.0
      %v272 = vadd.f32 %v270, %v271
      %v273 = vsel %vm223, %v215, 0.0
      %v274 = vadd.f32 %v272, %v273
      %v275 = vsel %vm223, %v216, 0.0
      %v276 = vadd.f32 %v274, %v275
      %v277 = vsel %vm223, %v217, 0.0
      %v278 = vadd.f32 %v276, %v277
      %v279 = vsel %vm223, %v218, 0.0
      %v280 = vadd.f32 %v278, %v279
      %v281 = vsel %vm223, %v219, 0.0
      %v282 = vadd.f32 %v280, %v281
      %v283 = vsel %vm223, %v220, 0.0
      %v284 = vadd.f32 %v282, %v283
      %v285 = vsel %vm223, %v221, 0.0
      %v286 = vadd.f32 %v284, %v285
      %v287 = vrot.slane %v286, 4
      %v288 = vadd.f32 %v286, %v287
      %v289 = vrot.slane %v288, 2
      %v290 = vadd.f32 %v288, %v289
      %v291 = vrot.slane %v290, 1
      %v292 = vadd.f32 %v290, %v291
      %v293 = vadd.f32 %v222, %v292
      %vm294 = vcmask 24576
      %295 = vst.msk [vmem:[#allocation2] sm:$0x1] %vm294, %v293
      %v296 = vld [vmem:[#allocation3] sm:$0x1]
      %v297 = vmul.f32 %v190, %v190
      %v298 = vmul.f32 %v191, %v191
      %v299 = vmul.f32 %v192, %v192
      %v300 = vmul.f32 %v193, %v193
      %v301 = vmul.f32 %v194, %v194
      %v302 = vmul.f32 %v195, %v195
      %v303 = vmul.f32 %v196, %v196
      %v304 = vmul.f32 %v197, %v197
      %v305 = vmul.f32 %v198, %v198
      %v306 = vmul.f32 %v199, %v199
      %v307 = vmul.f32 %v200, %v200
      %v308 = vmul.f32 %v201, %v201
      %v309 = vmul.f32 %v202, %v202
      %v310 = vmul.f32 %v203, %v203
      %v311 = vmul.f32 %v204, %v204
      %v312 = vmul.f32 %v205, %v205
      %v313 = vmul.f32 %v206, %v206
      %v314 = vmul.f32 %v207, %v207
      %v315 = vmul.f32 %v208, %v208
      %v316 = vmul.f32 %v209, %v209
      %v317 = vmul.f32 %v210, %v210
      %v318 = vmul.f32 %v211, %v211
      %v319 = vmul.f32 %v212, %v212
      %v320 = vmul.f32 %v213, %v213
      %v321 = vmul.f32 %v214, %v214
      %v322 = vmul.f32 %v215, %v215
      %v323 = vmul.f32 %v216, %v216
      %v324 = vmul.f32 %v217, %v217
      %v325 = vmul.f32 %v218, %v218
      %v326 = vmul.f32 %v219, %v219
      %v327 = vmul.f32 %v220, %v220
      %v328 = vmul.f32 %v221, %v221
      %v329 = vsel %vm223, %v297, 0.0
      %v330 = vsel %vm223, %v298, 0.0
      %v331 = vadd.f32 %v329, %v330
      %v332 = vsel %vm223, %v299, 0.0
      %v333 = vadd.f32 %v331, %v332
      %v334 = vsel %vm223, %v300, 0.0
      %v335 = vadd.f32 %v333, %v334
      %v336 = vsel %vm223, %v301, 0.0
      %v337 = vadd.f32 %v335, %v336
      %v338 = vsel %vm223, %v302, 0.0
      %v339 = vadd.f32 %v337, %v338
      %v340 = vsel %vm223, %v303, 0.0
      %v341 = vadd.f32 %v339, %v340
      %v342 = vsel %vm223, %v304, 0.0
      %v343 = vadd.f32 %v341, %v342
      %v344 = vsel %vm223, %v305, 0.0
      %v345 = vadd.f32 %v343, %v344
      %v346 = vsel %vm223, %v306, 0.0
      %v347 = vadd.f32 %v345, %v346
      %v348 = vsel %vm223, %v307, 0.0
      %v349 = vadd.f32 %v347, %v348
      %v350 = vsel %vm223, %v308, 0.0
      %v351 = vadd.f32 %v349, %v350
      %v352 = vsel %vm223, %v309, 0.0
      %v353 = vadd.f32 %v351, %v352
      %v354 = vsel %vm223, %v310, 0.0
      %v355 = vadd.f32 %v353, %v354
      %v356 = vsel %vm223, %v311, 0.0
      %v357 = vadd.f32 %v355, %v356
      %v358 = vsel %vm223, %v312, 0.0
      %v359 = vadd.f32 %v357, %v358
      %v360 = vsel %vm223, %v313, 0.0
      %v361 = vadd.f32 %v359, %v360
      %v362 = vsel %vm223, %v314, 0.0
      %v363 = vadd.f32 %v361, %v362
      %v364 = vsel %vm223, %v315, 0.0
      %v365 = vadd.f32 %v363, %v364
      %v366 = vsel %vm223, %v316, 0.0
      %v367 = vadd.f32 %v365, %v366
      %v368 = vsel %vm223, %v317, 0.0
      %v369 = vadd.f32 %v367, %v368
      %v370 = vsel %vm223, %v318, 0.0
      %v371 = vadd.f32 %v369, %v370
      %v372 = vsel %vm223, %v319, 0.0
      %v373 = vadd.f32 %v371, %v372
      %v374 = vsel %vm223, %v320, 0.0
      %v375 = vadd.f32 %v373, %v374
      %v376 = vsel %vm223, %v321, 0.0
      %v377 = vadd.f32 %v375, %v376
      %v378 = vsel %vm223, %v322, 0.0
      %v379 = vadd.f32 %v377, %v378
      %v380 = vsel %vm223, %v323, 0.0
      %v381 = vadd.f32 %v379, %v380
      %v382 = vsel %vm223, %v324, 0.0
      %v383 = vadd.f32 %v381, %v382
      %v384 = vsel %vm223, %v325, 0.0
      %v385 = vadd.f32 %v383, %v384
      %v386 = vsel %vm223, %v326, 0.0
      %v387 = vadd.f32 %v385, %v386
      %v388 = vsel %vm223, %v327, 0.0
      %v389 = vadd.f32 %v387, %v388
      %v390 = vsel %vm223, %v328, 0.0
      %v391 = vadd.f32 %v389, %v390
      %v392 = vrot.slane %v391, 4
      %v393 = vadd.f32 %v391, %v392
      %v394 = vrot.slane %v393, 2
      %v395 = vadd.f32 %v393, %v394
      %v396 = vrot.slane %v395, 1
      %v397 = vadd.f32 %v395, %v396
      %v398 = vadd.f32 %v296, %v397
      %399 = vst.msk [vmem:[#allocation3] sm:$0x1] %vm294, %v398
      %p400 = scmp.eq.s32.totalorder %s16, 1
      // Predicated region
      $region37: #{transition_block_forward.5} parent=31 // pred_check
        %p401 = pneg %p400
      $region38: #{transition_block_forward.5} parent=31 // pred_check_branch
        %403 = sbr.rel (%p401) target = $region40
      $region39: #{transition_block_forward.5} parent=31 // pred_region
        %v404 = vld [vmem:[#allocation2] sm:$0x1]
        %v405 = vmul.f32 %v404, 0.001953125
        %v406 = vld [vmem:[#allocation3] sm:$0x1]
        %v407 = vmul.f32 %v406, 0.001953125
        %v408 = vmul.f32 %v405, %v405
        %v409 = vsub.f32 %v407, %v408
        %v410 = vld [vmem:[%s1] sm:$0x1]
        %v411 = vadd.f32 %v409, 1e-05
        %v412 = vrsqrt.pop %v411
        %v413 = vmul.f32 %v410, %v412
        %414 = vst.msk [vmem:[%s3] sm:$0x1] %vm294, %v413
        %v415 = vld [vmem:[%s2] sm:$0x1]
        %v416 = vmul.f32 %v405, %v413
        %v417 = vsub.f32 %v415, %v416
        %418 = vst.msk [vmem:[%s4] sm:$0x1] %vm294, %v417
      $region40: #{transition_block_forward.5} parent=31 // pred_fallthru
        _
      // Predicated region
      $region41: #{transition_block_forward.5} parent=31 // pred_check
        %p419 = pneg %p97
      $region42: #{transition_block_forward.5} parent=31 // pred_check_branch
        %421 = sbr.rel (%p419) target = $region44
      $region43: #{transition_block_forward.5} parent=31 // pred_region
        _
      $region44: #{transition_block_forward.5} parent=31 // pred_fallthru
        _
      // Predicated region
      $region45: #{transition_block_forward.5} parent=31 // pred_check
        %p422 = pneg %p118
      $region46: #{transition_block_forward.5} parent=31 // pred_check_branch
        %424 = sbr.rel (%p422) target = $region48
      $region47: #{transition_block_forward.5} parent=31 // pred_region
        _
      $region48: #{transition_block_forward.5} parent=31 // pred_fallthru
        _
      // Predicated region
      $region49: #{transition_block_forward.5} parent=31 // pred_check
        %p425 = pneg %p97
      $region50: #{transition_block_forward.5} parent=31 // pred_check_branch
        %427 = sbr.rel (%p425) target = $region52
      $region51: #{transition_block_forward.5} parent=31 // pred_region
        _
      $region52: #{transition_block_forward.5} parent=31 // pred_fallthru
        _
      // Predicated region
      $region53: #{transition_block_forward.5} parent=31 // pred_check
        %p428 = pneg %p118
      $region54: #{transition_block_forward.5} parent=31 // pred_check_branch
        %430 = sbr.rel (%p428) target = $region56
      $region55: #{transition_block_forward.5} parent=31 // pred_region
        _
      $region56: #{transition_block_forward.5} parent=31 // pred_fallthru
        _
    $region32: #{transition_block_forward.5} parent=5 // pred_fallthru
      _
    %p431 = scmp.le.s32.totalorder 2, %s11
    // Predicated region
    $region57: #{transition_block_forward.5} parent=5 // pred_check
      %p432 = pneg %p431
    $region58: #{transition_block_forward.5} parent=5 // pred_check_branch
      %434 = sbr.rel (%p432) target = $region60
    $region59: #{transition_block_forward.5} parent=5 // pred_region
      %s435 = ssub.s32 %s11, 2
    $region60: #{transition_block_forward.5} parent=5 // pred_fallthru
      _
  $region6: #{transition_block_forward.5} parent=0 // loop_footer
    %s15 = sadd.s32 1, %s11
  $region7: #{transition_block_forward.5} parent=0 // loop_footer_branch
    %10 = sbr.rel target = $region3
  $region8: #{transition_block_forward.5} parent=0 // loop_exit
    _

// kernel: transition_block_forward.8
$region0: #{transition_block_forward.8}
  #allocation0 [shape = 'u32[]', space=smem, size = 0x4, offset = 0x4, fixed_abs, tag = 'smem constant byte address 0x4 - core index']
  #allocation1 [shape = 'u32[144,128]{1,0:T(1,128)}', space=vmem, size = 0x12000, scoped, tag = 'internal scratch']
  #allocation2 [shape = 'f32[1,8]{1,0:T(1,128)}', space=vmem, size = 0x200, scoped, tag = 'scratch operand']
  #allocation3 [shape = 'f32[1,8]{1,0:T(1,128)}', space=vmem, size = 0x200, scoped, tag = 'scratch operand']
  %s0 = inlined_call_operand.vmem [shape: f32[128,8], index: 0, kind: input, shape index: {}]
  %s1 = inlined_call_operand.vmem [shape: f32[1,8], index: 1, kind: input, shape index: {}]
  %s2 = inlined_call_operand.vmem [shape: f32[1,8], index: 2, kind: input, shape index: {}]
  %s3 = inlined_call_operand.vmem [shape: f32[1,8], index: 3, kind: output, shape index: {0}]
  %s4 = inlined_call_operand.vmem [shape: f32[1,8], index: 4, kind: output, shape index: {1}]
  %5 = xla_tuple %s3, %s4
  %s6 = sld [smem:[#allocation0]]
  $region38: #{transition_block_forward.8} parent=0
    _
  %s8 = ssub.s32 1, %s6
  %s9 = scalar_select 0, %s8, %s6
  // Predicated region
  $region2: #{transition_block_forward.8} parent=0 // pred_check
    _
  $region3: #{transition_block_forward.8} parent=0 // pred_check_branch
    %11 = sbr.rel (0) target = $region5
  $region4: #{transition_block_forward.8} parent=0 // pred_region
    _
  $region5: #{transition_block_forward.8} parent=0 // pred_fallthru
    _
  // Predicated region
  $region6: #{transition_block_forward.8} parent=0 // pred_check
    _
  $region7: #{transition_block_forward.8} parent=0 // pred_check_branch
    %13 = sbr.rel (0) target = $region9
  $region8: #{transition_block_forward.8} parent=0 // pred_region
    _
  $region9: #{transition_block_forward.8} parent=0 // pred_fallthru
    _
  // Predicated region
  $region10: #{transition_block_forward.8} parent=0 // pred_check
    _
  $region11: #{transition_block_forward.8} parent=0 // pred_check_branch
    %15 = sbr.rel (0) target = $region13
  $region12: #{transition_block_forward.8} parent=0 // pred_region
    _
  $region13: #{transition_block_forward.8} parent=0 // pred_fallthru
    _
  %p16 = scmp.eq.s32.totalorder 0, 0
  // Predicated region
  $region14: #{transition_block_forward.8} parent=0 // pred_check
    %p17 = pneg %p16
  $region15: #{transition_block_forward.8} parent=0 // pred_check_branch
    %19 = sbr.rel (%p17) target = $region17
  $region16: #{transition_block_forward.8} parent=0 // pred_region
    %vm20 = vcmask 57344
    %21 = vst.msk [vmem:[#allocation2] sm:$0x1] %vm20, 0.0
    %22 = vst.msk [vmem:[#allocation3] sm:$0x1] %vm20, 0.0
  $region17: #{transition_block_forward.8} parent=0 // pred_fallthru
    _
  %v23 = vld [vmem:[%s0] sm:$0xff]
  %v24 = vld [vmem:[%s0 + $0x8] sm:$0xff]
  %v25 = vld [vmem:[%s0 + $0x10] sm:$0xff]
  %v26 = vld [vmem:[%s0 + $0x18] sm:$0xff]
  %v27 = vld [vmem:[%s0 + $0x20] sm:$0xff]
  %v28 = vld [vmem:[%s0 + $0x28] sm:$0xff]
  %v29 = vld [vmem:[%s0 + $0x30] sm:$0xff]
  %v30 = vld [vmem:[%s0 + $0x38] sm:$0xff]
  %v31 = vld [vmem:[%s0 + $0x40] sm:$0xff]
  %v32 = vld [vmem:[%s0 + $0x48] sm:$0xff]
  %v33 = vld [vmem:[%s0 + $0x50] sm:$0xff]
  %v34 = vld [vmem:[%s0 + $0x58] sm:$0xff]
  %v35 = vld [vmem:[%s0 + $0x60] sm:$0xff]
  %v36 = vld [vmem:[%s0 + $0x68] sm:$0xff]
  %v37 = vld [vmem:[%s0 + $0x70] sm:$0xff]
  %v38 = vld [vmem:[%s0 + $0x78] sm:$0xff]
  %v39 = vld [vmem:[#allocation2] sm:$0x1]
  %vm40 = vcmask 64512
  %v41 = vsel %vm40, %v23, 0.0
  %v42 = vsel %vm40, %v24, 0.0
  %v43 = vadd.f32 %v41, %v42
  %v44 = vsel %vm40, %v25, 0.0
  %v45 = vadd.f32 %v43, %v44
  %v46 = vsel %vm40, %v26, 0.0
  %v47 = vadd.f32 %v45, %v46
  %v48 = vsel %vm40, %v27, 0.0
  %v49 = vadd.f32 %v47, %v48
  %v50 = vsel %vm40, %v28, 0.0
  %v51 = vadd.f32 %v49, %v50
  %v52 = vsel %vm40, %v29, 0.0
  %v53 = vadd.f32 %v51, %v52
  %v54 = vsel %vm40, %v30, 0.0
  %v55 = vadd.f32 %v53, %v54
  %v56 = vsel %vm40, %v31, 0.0
  %v57 = vadd.f32 %v55, %v56
  %v58 = vsel %vm40, %v32, 0.0
  %v59 = vadd.f32 %v57, %v58
  %v60 = vsel %vm40, %v33, 0.0
  %v61 = vadd.f32 %v59, %v60
  %v62 = vsel %vm40, %v34, 0.0
  %v63 = vadd.f32 %v61, %v62
  %v64 = vsel %vm40, %v35, 0.0
  %v65 = vadd.f32 %v63, %v64
  %v66 = vsel %vm40, %v36, 0.0
  %v67 = vadd.f32 %v65, %v66
  %v68 = vsel %vm40, %v37, 0.0
  %v69 = vadd.f32 %v67, %v68
  %v70 = vsel %vm40, %v38, 0.0
  %v71 = vadd.f32 %v69, %v70
  %v72 = vrot.slane %v71, 4
  %v73 = vadd.f32 %v71, %v72
  %v74 = vrot.slane %v73, 2
  %v75 = vadd.f32 %v73, %v74
  %v76 = vrot.slane %v75, 1
  %v77 = vadd.f32 %v75, %v76
  %v78 = vadd.f32 %v39, %v77
  %vm79 = vcmask 57344
  %80 = vst.msk [vmem:[#allocation2] sm:$0x1] %vm79, %v78
  %v81 = vld [vmem:[#allocation3] sm:$0x1]
  %v82 = vmul.f32 %v23, %v23
  %v83 = vmul.f32 %v24, %v24
  %v84 = vmul.f32 %v25, %v25
  %v85 = vmul.f32 %v26, %v26
  %v86 = vmul.f32 %v27, %v27
  %v87 = vmul.f32 %v28, %v28
  %v88 = vmul.f32 %v29, %v29
  %v89 = vmul.f32 %v30, %v30
  %v90 = vmul.f32 %v31, %v31
  %v91 = vmul.f32 %v32, %v32
  %v92 = vmul.f32 %v33, %v33
  %v93 = vmul.f32 %v34, %v34
  %v94 = vmul.f32 %v35, %v35
  %v95 = vmul.f32 %v36, %v36
  %v96 = vmul.f32 %v37, %v37
  %v97 = vmul.f32 %v38, %v38
  %v98 = vsel %vm40, %v82, 0.0
  %v99 = vsel %vm40, %v83, 0.0
  %v100 = vadd.f32 %v98, %v99
  %v101 = vsel %vm40, %v84, 0.0
  %v102 = vadd.f32 %v100, %v101
  %v103 = vsel %vm40, %v85, 0.0
  %v104 = vadd.f32 %v102, %v103
  %v105 = vsel %vm40, %v86, 0.0
  %v106 = vadd.f32 %v104, %v105
  %v107 = vsel %vm40, %v87, 0.0
  %v108 = vadd.f32 %v106, %v107
  %v109 = vsel %vm40, %v88, 0.0
  %v110 = vadd.f32 %v108, %v109
  %v111 = vsel %vm40, %v89, 0.0
  %v112 = vadd.f32 %v110, %v111
  %v113 = vsel %vm40, %v90, 0.0
  %v114 = vadd.f32 %v112, %v113
  %v115 = vsel %vm40, %v91, 0.0
  %v116 = vadd.f32 %v114, %v115
  %v117 = vsel %vm40, %v92, 0.0
  %v118 = vadd.f32 %v116, %v117
  %v119 = vsel %vm40, %v93, 0.0
  %v120 = vadd.f32 %v118, %v119
  %v121 = vsel %vm40, %v94, 0.0
  %v122 = vadd.f32 %v120, %v121
  %v123 = vsel %vm40, %v95, 0.0
  %v124 = vadd.f32 %v122, %v123
  %v125 = vsel %vm40, %v96, 0.0
  %v126 = vadd.f32 %v124, %v125
  %v127 = vsel %vm40, %v97, 0.0
  %v128 = vadd.f32 %v126, %v127
  %v129 = vrot.slane %v128, 4
  %v130 = vadd.f32 %v128, %v129
  %v131 = vrot.slane %v130, 2
  %v132 = vadd.f32 %v130, %v131
  %v133 = vrot.slane %v132, 1
  %v134 = vadd.f32 %v132, %v133
  %v135 = vadd.f32 %v81, %v134
  %136 = vst.msk [vmem:[#allocation3] sm:$0x1] %vm79, %v135
  // Predicated region
  $region18: #{transition_block_forward.8} parent=0 // pred_check
    %p137 = pneg %p16
  $region19: #{transition_block_forward.8} parent=0 // pred_check_branch
    %139 = sbr.rel (%p137) target = $region21
  $region20: #{transition_block_forward.8} parent=0 // pred_region
    %v140 = vld [vmem:[#allocation2] sm:$0x1]
    %v141 = vmul.f32 %v140, 0.0078125
    %v142 = vld [vmem:[#allocation3] sm:$0x1]
    %v143 = vmul.f32 %v142, 0.0078125
    %v144 = vmul.f32 %v141, %v141
    %v145 = vsub.f32 %v143, %v144
    %v146 = vld [vmem:[%s1] sm:$0x1]
    %v147 = vadd.f32 %v145, 1e-05
    %v148 = vrsqrt.pop %v147
    %v149 = vmul.f32 %v146, %v148
    %150 = vst.msk [vmem:[%s3] sm:$0x1] %vm79, %v149
    %v151 = vld [vmem:[%s2] sm:$0x1]
    %v152 = vmul.f32 %v141, %v149
    %v153 = vsub.f32 %v151, %v152
    %154 = vst.msk [vmem:[%s4] sm:$0x1] %vm79, %v153
  $region21: #{transition_block_forward.8} parent=0 // pred_fallthru
    _
  // Predicated region
  $region22: #{transition_block_forward.8} parent=0 // pred_check
    _
  $region23: #{transition_block_forward.8} parent=0 // pred_check_branch
    %156 = sbr.rel (0) target = $region25
  $region24: #{transition_block_forward.8} parent=0 // pred_region
    _
  $region25: #{transition_block_forward.8} parent=0 // pred_fallthru
    _
  // Predicated region
  $region26: #{transition_block_forward.8} parent=0 // pred_check
    _
  $region27: #{transition_block_forward.8} parent=0 // pred_check_branch
    %158 = sbr.rel (0) target = $region29
  $region28: #{transition_block_forward.8} parent=0 // pred_region
    _
  $region29: #{transition_block_forward.8} parent=0 // pred_fallthru
    _
  // Predicated region
  $region30: #{transition_block_forward.8} parent=0 // pred_check
    _
  $region31: #{transition_block_forward.8} parent=0 // pred_check_branch
    %160 = sbr.rel (0) target = $region33
  $region32: #{transition_block_forward.8} parent=0 // pred_region
    _
  $region33: #{transition_block_forward.8} parent=0 // pred_fallthru
    _
  // Predicated region
  $region34: #{transition_block_forward.8} parent=0 // pred_check
    _
  $region35: #{transition_block_forward.8} parent=0 // pred_check_branch
    %162 = sbr.rel (0) target = $region37
  $region36: #{transition_block_forward.8} parent=0 // pred_region
    _
  $region37: #{transition_block_forward.8} parent=0 // pred_fallthru
    _

// kernel: transition_block_forward.7
$region0: #{transition_block_forward.7}
  #allocation0 [shape = 'u32[]', space=smem, size = 0x4, offset = 0x4, fixed_abs, tag = 'smem constant byte address 0x4 - core index']
  #allocation1 [shape = 'u32[144,128]{1,0:T(1,128)}', space=vmem, size = 0x12000, scoped, tag = 'internal scratch']
  #allocation2 [shape = 'f32[128,128]{1,0:T(8,128)}', space=vmem, size = 0x10000, scoped, tag = 'scratch operand']
  %s0 = inlined_call_operand.vmem [shape: f32[128,128], index: 0, kind: input, shape index: {}]
  %s1 = inlined_call_operand.vmem [shape: f32[1,128], index: 1, kind: input, shape index: {}]
  %s2 = inlined_call_operand.vmem [shape: f32[1,128], index: 2, kind: input, shape index: {}]
  %s3 = inlined_call_operand.vmem [shape: bf16[128,128], index: 3, kind: input, shape index: {}]
  %s4 = inlined_call_operand.vmem [shape: f32[1,128], index: 4, kind: input, shape index: {}]
  %s5 = inlined_call_operand.vmem [shape: f32[128,128], index: 5, kind: output, shape index: {}]
  %s6 = sld [smem:[#allocation0]]
  $region38: #{transition_block_forward.7} parent=0
    _
  %s8 = ssub.s32 1, %s6
  %s9 = scalar_select 0, %s8, %s6
  // Predicated region
  $region2: #{transition_block_forward.7} parent=0 // pred_check
    _
  $region3: #{transition_block_forward.7} parent=0 // pred_check_branch
    %11 = sbr.rel (0) target = $region5
  $region4: #{transition_block_forward.7} parent=0 // pred_region
    _
  $region5: #{transition_block_forward.7} parent=0 // pred_fallthru
    _
  // Predicated region
  $region6: #{transition_block_forward.7} parent=0 // pred_check
    _
  $region7: #{transition_block_forward.7} parent=0 // pred_check_branch
    %13 = sbr.rel (0) target = $region9
  $region8: #{transition_block_forward.7} parent=0 // pred_region
    _
  $region9: #{transition_block_forward.7} parent=0 // pred_fallthru
    _
  // Predicated region
  $region10: #{transition_block_forward.7} parent=0 // pred_check
    _
  $region11: #{transition_block_forward.7} parent=0 // pred_check_branch
    %15 = sbr.rel (0) target = $region13
  $region12: #{transition_block_forward.7} parent=0 // pred_region
    _
  $region13: #{transition_block_forward.7} parent=0 // pred_fallthru
    _
  // Predicated region
  $region14: #{transition_block_forward.7} parent=0 // pred_check
    _
  $region15: #{transition_block_forward.7} parent=0 // pred_check_branch
    %17 = sbr.rel (0) target = $region17
  $region16: #{transition_block_forward.7} parent=0 // pred_region
    _
  $region17: #{transition_block_forward.7} parent=0 // pred_fallthru
    _
  // Predicated region
  $region18: #{transition_block_forward.7} parent=0 // pred_check
    _
  $region19: #{transition_block_forward.7} parent=0 // pred_check_branch
    %19 = sbr.rel (0) target = $region21
  $region20: #{transition_block_forward.7} parent=0 // pred_region
    _
  $region21: #{transition_block_forward.7} parent=0 // pred_fallthru
    _
  %p21 = scmp.eq.s32.totalorder 0, 0
  // Predicated region
  $region22: #{transition_block_forward.7} parent=0 // pred_check
    %p22 = pneg %p21
  $region23: #{transition_block_forward.7} parent=0 // pred_check_branch
    %24 = sbr.rel (%p22) target = $region25
  $region24: #{transition_block_forward.7} parent=0 // pred_region
    %25 = vst [vmem:[#allocation2] sm:$0xff] 0.0
    %26 = vst [vmem:[#allocation2 + $0x8] sm:$0xff] 0.0
    %27 = vst [vmem:[#allocation2 + $0x10] sm:$0xff] 0.0
    %28 = vst [vmem:[#allocation2 + $0x18] sm:$0xff] 0.0
    %29 = vst [vmem:[#allocation2 + $0x20] sm:$0xff] 0.0
    %30 = vst [vmem:[#allocation2 + $0x28] sm:$0xff] 0.0
    %31 = vst [vmem:[#allocation2 + $0x30] sm:$0xff] 0.0
    %32 = vst [vmem:[#allocation2 + $0x38] sm:$0xff] 0.0
    %33 = vst [vmem:[#allocation2 + $0x40] sm:$0xff] 0.0
    %34 = vst [vmem:[#allocation2 + $0x48] sm:$0xff] 0.0
    %35 = vst [vmem:[#allocation2 + $0x50] sm:$0xff] 0.0
    %36 = vst [vmem:[#allocation2 + $0x58] sm:$0xff] 0.0
    %37 = vst [vmem:[#allocation2 + $0x60] sm:$0xff] 0.0
    %38 = vst [vmem:[#allocation2 + $0x68] sm:$0xff] 0.0
    %39 = vst [vmem:[#allocation2 + $0x70] sm:$0xff] 0.0
    %40 = vst [vmem:[#allocation2 + $0x78] sm:$0xff] 0.0
  $region25: #{transition_block_forward.7} parent=0 // pred_fallthru
    _
  %v41 = vld [vmem:[%s0] sm:$0xff]
  %v42 = vld [vmem:[%s0 + $0x8] sm:$0xff]
  %v43 = vld [vmem:[%s0 + $0x10] sm:$0xff]
  %v44 = vld [vmem:[%s0 + $0x18] sm:$0xff]
  %v45 = vld [vmem:[%s0 + $0x20] sm:$0xff]
  %v46 = vld [vmem:[%s0 + $0x28] sm:$0xff]
  %v47 = vld [vmem:[%s0 + $0x30] sm:$0xff]
  %v48 = vld [vmem:[%s0 + $0x38] sm:$0xff]
  %v49 = vld [vmem:[%s0 + $0x40] sm:$0xff]
  %v50 = vld [vmem:[%s0 + $0x48] sm:$0xff]
  %v51 = vld [vmem:[%s0 + $0x50] sm:$0xff]
  %v52 = vld [vmem:[%s0 + $0x58] sm:$0xff]
  %v53 = vld [vmem:[%s0 + $0x60] sm:$0xff]
  %v54 = vld [vmem:[%s0 + $0x68] sm:$0xff]
  %v55 = vld [vmem:[%s0 + $0x70] sm:$0xff]
  %v56 = vld [vmem:[%s0 + $0x78] sm:$0xff]
  %v57 = vld [vmem:[%s1] sm:$0x1]
  %v59 = vlaneseq
  %v60 = vshrl.u32 %v59, 7
  %v61 = vsub.s32 0, %v60
  %v62 = vrot.slane %v57, %v61
  %v64 = vmul.f32 %v41, %v62
  %v65 = vmul.f32 %v42, %v62
  %v66 = vmul.f32 %v43, %v62
  %v67 = vmul.f32 %v44, %v62
  %v68 = vmul.f32 %v45, %v62
  %v69 = vmul.f32 %v46, %v62
  %v70 = vmul.f32 %v47, %v62
  %v71 = vmul.f32 %v48, %v62
  %v72 = vmul.f32 %v49, %v62
  %v73 = vmul.f32 %v50, %v62
  %v74 = vmul.f32 %v51, %v62
  %v75 = vmul.f32 %v52, %v62
  %v76 = vmul.f32 %v53, %v62
  %v77 = vmul.f32 %v54, %v62
  %v78 = vmul.f32 %v55, %v62
  %v79 = vmul.f32 %v56, %v62
  %v80 = vld [vmem:[%s2] sm:$0x1]
  %v82 = vlaneseq
  %v83 = vshrl.u32 %v82, 7
  %v84 = vsub.s32 0, %v83
  %v85 = vrot.slane %v80, %v84
  %v87 = vadd.f32 %v64, %v85
  %v88 = vadd.f32 %v65, %v85
  %v89 = vadd.f32 %v66, %v85
  %v90 = vadd.f32 %v67, %v85
  %v91 = vadd.f32 %v68, %v85
  %v92 = vadd.f32 %v69, %v85
  %v93 = vadd.f32 %v70, %v85
  %v94 = vadd.f32 %v71, %v85
  %v95 = vadd.f32 %v72, %v85
  %v96 = vadd.f32 %v73, %v85
  %v97 = vadd.f32 %v74, %v85
  %v98 = vadd.f32 %v75, %v85
  %v99 = vadd.f32 %v76, %v85
  %v100 = vadd.f32 %v77, %v85
  %v101 = vadd.f32 %v78, %v85
  %v102 = vadd.f32 %v79, %v85
  %vm103 = vcmp.gt.f32.partialorder %v87, 0.0
  %vm104 = vcmp.gt.f32.partialorder %v88, 0.0
  %vm105 = vcmp.gt.f32.partialorder %v89, 0.0
  %vm106 = vcmp.gt.f32.partialorder %v90, 0.0
  %vm107 = vcmp.gt.f32.partialorder %v91, 0.0
  %vm108 = vcmp.gt.f32.partialorder %v92, 0.0
  %vm109 = vcmp.gt.f32.partialorder %v93, 0.0
  %vm110 = vcmp.gt.f32.partialorder %v94, 0.0
  %vm111 = vcmp.gt.f32.partialorder %v95, 0.0
  %vm112 = vcmp.gt.f32.partialorder %v96, 0.0
  %vm113 = vcmp.gt.f32.partialorder %v97, 0.0
  %vm114 = vcmp.gt.f32.partialorder %v98, 0.0
  %vm115 = vcmp.gt.f32.partialorder %v99, 0.0
  %vm116 = vcmp.gt.f32.partialorder %v100, 0.0
  %vm117 = vcmp.gt.f32.partialorder %v101, 0.0
  %vm118 = vcmp.gt.f32.partialorder %v102, 0.0
  %v119 = vmul.f32 %v87, 0.1
  %v120 = vmul.f32 %v88, 0.1
  %v121 = vmul.f32 %v89, 0.1
  %v122 = vmul.f32 %v90, 0.1
  %v123 = vmul.f32 %v91, 0.1
  %v124 = vmul.f32 %v92, 0.1
  %v125 = vmul.f32 %v93, 0.1
  %v126 = vmul.f32 %v94, 0.1
  %v127 = vmul.f32 %v95, 0.1
  %v128 = vmul.f32 %v96, 0.1
  %v129 = vmul.f32 %v97, 0.1
  %v130 = vmul.f32 %v98, 0.1
  %v131 = vmul.f32 %v99, 0.1
  %v132 = vmul.f32 %v100, 0.1
  %v133 = vmul.f32 %v101, 0.1
  %v134 = vmul.f32 %v102, 0.1
  %v135 = vsel %vm103, %v87, %v119
  %v136 = vsel %vm104, %v88, %v120
  %v137 = vsel %vm105, %v89, %v121
  %v138 = vsel %vm106, %v90, %v122
  %v139 = vsel %vm107, %v91, %v123
  %v140 = vsel %vm108, %v92, %v124
  %v141 = vsel %vm109, %v93, %v125
  %v142 = vsel %vm110, %v94, %v126
  %v143 = vsel %vm111, %v95, %v127
  %v144 = vsel %vm112, %v96, %v128
  %v145 = vsel %vm113, %v97, %v129
  %v146 = vsel %vm114, %v98, %v130
  %v147 = vsel %vm115, %v99, %v131
  %v148 = vsel %vm116, %v100, %v132
  %v149 = vsel %vm117, %v101, %v133
  %v150 = vsel %vm118, %v102, %v134
  %v151 = vld [vmem:[#allocation2] sm:$0xff]
  %v152 = vld [vmem:[#allocation2 + $0x8] sm:$0xff]
  %v153 = vld [vmem:[#allocation2 + $0x10] sm:$0xff]
  %v154 = vld [vmem:[#allocation2 + $0x18] sm:$0xff]
  %v155 = vld [vmem:[#allocation2 + $0x20] sm:$0xff]
  %v156 = vld [vmem:[#allocation2 + $0x28] sm:$0xff]
  %v157 = vld [vmem:[#allocation2 + $0x30] sm:$0xff]
  %v158 = vld [vmem:[#allocation2 + $0x38] sm:$0xff]
  %v159 = vld [vmem:[#allocation2 + $0x40] sm:$0xff]
  %v160 = vld [vmem:[#allocation2 + $0x48] sm:$0xff]
  %v161 = vld [vmem:[#allocation2 + $0x50] sm:$0xff]
  %v162 = vld [vmem:[#allocation2 + $0x58] sm:$0xff]
  %v163 = vld [vmem:[#allocation2 + $0x60] sm:$0xff]
  %v164 = vld [vmem:[#allocation2 + $0x68] sm:$0xff]
  %v165 = vld [vmem:[#allocation2 + $0x70] sm:$0xff]
  %v166 = vld [vmem:[#allocation2 + $0x78] sm:$0xff]
  %v167 = vpack.c.bf16 %v136, %v135
  %v168 = vpack.c.bf16 %v138, %v137
  %v169 = vpack.c.bf16 %v140, %v139
  %v170 = vpack.c.bf16 %v142, %v141
  %v171 = vpack.c.bf16 %v144, %v143
  %v172 = vpack.c.bf16 %v146, %v145
  %v173 = vpack.c.bf16 %v148, %v147
  %v174 = vpack.c.bf16 %v150, %v149
  %v175 = vld [vmem:[%s3] sm:$0xf]
  %v176 = vld [vmem:[%s3 + $0x4] sm:$0xf]
  %v177 = vld [vmem:[%s3 + $0x8] sm:$0xf]
  %v178 = vld [vmem:[%s3 + $0xc] sm:$0xf]
  %v179 = vld [vmem:[%s3 + $0x10] sm:$0xf]
  %v180 = vld [vmem:[%s3 + $0x14] sm:$0xf]
  %v181 = vld [vmem:[%s3 + $0x18] sm:$0xf]
  %v182 = vld [vmem:[%s3 + $0x1c] sm:$0xf]
  %v183 = vld [vmem:[%s3 + $0x20] sm:$0xf]
  %v184 = vld [vmem:[%s3 + $0x24] sm:$0xf]
  %v185 = vld [vmem:[%s3 + $0x28] sm:$0xf]
  %v186 = vld [vmem:[%s3 + $0x2c] sm:$0xf]
  %v187 = vld [vmem:[%s3 + $0x30] sm:$0xf]
  %v188 = vld [vmem:[%s3 + $0x34] sm:$0xf]
  %v189 = vld [vmem:[%s3 + $0x38] sm:$0xf]
  %v190 = vld [vmem:[%s3 + $0x3c] sm:$0xf]
  %v207 = vunpack.c.l.b16 %v175
  %v208 = vunpack.c.l.b16 %v176
  %v209 = vunpack.c.l.b16 %v177
  %v210 = vunpack.c.l.b16 %v178
  %v211 = vunpack.c.l.b16 %v179
  %v212 = vunpack.c.l.b16 %v180
  %v213 = vunpack.c.l.b16 %v181
  %v214 = vunpack.c.l.b16 %v182
  %v215 = vunpack.c.l.b16 %v183
  %v216 = vunpack.c.l.b16 %v184
  %v217 = vunpack.c.l.b16 %v185
  %v218 = vunpack.c.l.b16 %v186
  %v219 = vunpack.c.l.b16 %v187
  %v220 = vunpack.c.l.b16 %v188
  %v221 = vunpack.c.l.b16 %v189
  %v222 = vunpack.c.l.b16 %v190
  %v223 = vpack.c.b16 %v208, %v207
  %v224 = vpack.c.b16 %v210, %v209
  %v225 = vpack.c.b16 %v212, %v211
  %v226 = vpack.c.b16 %v214, %v213
  %v227 = vpack.c.b16 %v216, %v215
  %v228 = vpack.c.b16 %v218, %v217
  %v229 = vpack.c.b16 %v220, %v219
  %v230 = vpack.c.b16 %v222, %v221
  %239 = vmatprep.subr.bf16.mxu0 0
  %240 = vmatpush1.bf16.msra.mxu0 %v230
  %241 = vmatprep.subr.bf16.mxu0 0
  %242 = vmatpush1.bf16.msra.mxu0 %v229
  %243 = vmatprep.subr.bf16.mxu0 0
  %244 = vmatpush1.bf16.msra.mxu0 %v228
  %245 = vmatprep.subr.bf16.mxu0 0
  %246 = vmatpush1.bf16.msra.mxu0 %v227
  %247 = vmatprep.subr.bf16.mxu0 0
  %248 = vmatpush1.bf16.msra.mxu0 %v226
  %249 = vmatprep.subr.bf16.mxu0 0
  %250 = vmatpush1.bf16.msra.mxu0 %v225
  %251 = vmatprep.subr.bf16.mxu0 0
  %252 = vmatpush1.bf16.msra.mxu0 %v224
  %253 = vmatprep.subr.bf16.mxu0 0
  %254 = vmatpush1.bf16.msra.mxu0 %v223
  %255 = vmatprep.subr.bf16.mxu0 0
  %256 = vmatpush2.bf16.msra.mxu0 0
  %257 = vmatprep.subr.bf16.mxu0 0
  %258 = vmatpush2.bf16.msra.mxu0 0
  %259 = vmatprep.subr.bf16.mxu0 0
  %260 = vmatpush2.bf16.msra.mxu0 0
  %261 = vmatprep.subr.bf16.mxu0 0
  %262 = vmatpush2.bf16.msra.mxu0 0
  %263 = vmatprep.subr.bf16.mxu0 0
  %264 = vmatpush2.bf16.msra.mxu0 0
  %265 = vmatprep.subr.bf16.mxu0 0
  %266 = vmatpush2.bf16.msra.mxu0 0
  %267 = vmatprep.subr.bf16.mxu0 0
  %268 = vmatpush2.bf16.msra.mxu0 0
  %269 = vmatprep.subr.bf16.mxu0 0
  %270 = vmatpush2.bf16.msra.mxu0 0
  %271 = vmatprep.mubr.bf16.mxu0 0
  %272 = vmatmul.mubr.bf16.gmra.mxu0 %v167
  %v273 = vpop.f32.mrf.mxu0
  %v274 = vadd.f32 0.0, %v273
  %v275 = vpop.f32.mrf.mxu0
  %v276 = vpop.f32.mrf.mxu0
  %v277 = vadd.f32 0.0, %v276
  %v278 = vpop.f32.mrf.mxu0
  %279 = vmatprep.mubr.bf16.mxu0 0
  %280 = vmatmul.mubr.bf16.gmra.mxu0 %v168
  %v281 = vpop.f32.mrf.mxu0
  %v282 = vadd.f32 0.0, %v281
  %v283 = vpop.f32.mrf.mxu0
  %v284 = vpop.f32.mrf.mxu0
  %v285 = vadd.f32 0.0, %v284
  %v286 = vpop.f32.mrf.mxu0
  %287 = vmatprep.mubr.bf16.mxu0 0
  %288 = vmatmul.mubr.bf16.gmra.mxu0 %v169
  %v289 = vpop.f32.mrf.mxu0
  %v290 = vadd.f32 0.0, %v289
  %v291 = vpop.f32.mrf.mxu0
  %v292 = vpop.f32.mrf.mxu0
  %v293 = vadd.f32 0.0, %v292
  %v294 = vpop.f32.mrf.mxu0
  %295 = vmatprep.mubr.bf16.mxu0 0
  %296 = vmatmul.mubr.bf16.gmra.mxu0 %v170
  %v297 = vpop.f32.mrf.mxu0
  %v298 = vadd.f32 0.0, %v297
  %v299 = vpop.f32.mrf.mxu0
  %v300 = vpop.f32.mrf.mxu0
  %v301 = vadd.f32 0.0, %v300
  %v302 = vpop.f32.mrf.mxu0
  %303 = vmatprep.mubr.bf16.mxu0 0
  %304 = vmatmul.mubr.bf16.gmra.mxu0 %v171
  %v305 = vpop.f32.mrf.mxu0
  %v306 = vadd.f32 0.0, %v305
  %v307 = vpop.f32.mrf.mxu0
  %v308 = vpop.f32.mrf.mxu0
  %v309 = vadd.f32 0.0, %v308
  %v310 = vpop.f32.mrf.mxu0
  %311 = vmatprep.mubr.bf16.mxu0 0
  %312 = vmatmul.mubr.bf16.gmra.mxu0 %v172
  %v313 = vpop.f32.mrf.mxu0
  %v314 = vadd.f32 0.0, %v313
  %v315 = vpop.f32.mrf.mxu0
  %v316 = vpop.f32.mrf.mxu0
  %v317 = vadd.f32 0.0, %v316
  %v318 = vpop.f32.mrf.mxu0
  %319 = vmatprep.mubr.bf16.mxu0 0
  %320 = vmatmul.mubr.bf16.gmra.mxu0 %v173
  %v321 = vpop.f32.mrf.mxu0
  %v322 = vadd.f32 0.0, %v321
  %v323 = vpop.f32.mrf.mxu0
  %v324 = vpop.f32.mrf.mxu0
  %v325 = vadd.f32 0.0, %v324
  %v326 = vpop.f32.mrf.mxu0
  %327 = vmatprep.mubr.bf16.mxu0 0
  %328 = vmatmul.mubr.bf16.gmra.mxu0 %v174
  %v329 = vpop.f32.mrf.mxu0
  %v330 = vadd.f32 0.0, %v329
  %v331 = vpop.f32.mrf.mxu0
  %v332 = vpop.f32.mrf.mxu0
  %v333 = vadd.f32 0.0, %v332
  %v334 = vpop.f32.mrf.mxu0
  %335 = vdwg.mxu0
  %v336 = vadd.f32 %v151, %v274
  %v337 = vadd.f32 %v152, %v277
  %v338 = vadd.f32 %v153, %v282
  %v339 = vadd.f32 %v154, %v285
  %v340 = vadd.f32 %v155, %v290
  %v341 = vadd.f32 %v156, %v293
  %v342 = vadd.f32 %v157, %v298
  %v343 = vadd.f32 %v158, %v301
  %v344 = vadd.f32 %v159, %v306
  %v345 = vadd.f32 %v160, %v309
  %v346 = vadd.f32 %v161, %v314
  %v347 = vadd.f32 %v162, %v317
  %v348 = vadd.f32 %v163, %v322
  %v349 = vadd.f32 %v164, %v325
  %v350 = vadd.f32 %v165, %v330
  %v351 = vadd.f32 %v166, %v333
  %352 = vst [vmem:[#allocation2] sm:$0xff] %v336
  %353 = vst [vmem:[#allocation2 + $0x8] sm:$0xff] %v337
  %354 = vst [vmem:[#allocation2 + $0x10] sm:$0xff] %v338
  %355 = vst [vmem:[#allocation2 + $0x18] sm:$0xff] %v339
  %356 = vst [vmem:[#allocation2 + $0x20] sm:$0xff] %v340
  %357 = vst [vmem:[#allocation2 + $0x28] sm:$0xff] %v341
  %358 = vst [vmem:[#allocation2 + $0x30] sm:$0xff] %v342
  %359 = vst [vmem:[#allocation2 + $0x38] sm:$0xff] %v343
  %360 = vst [vmem:[#allocation2 + $0x40] sm:$0xff] %v344
  %361 = vst [vmem:[#allocation2 + $0x48] sm:$0xff] %v345
  %362 = vst [vmem:[#allocation2 + $0x50] sm:$0xff] %v346
  %363 = vst [vmem:[#allocation2 + $0x58] sm:$0xff] %v347
  %364 = vst [vmem:[#allocation2 + $0x60] sm:$0xff] %v348
  %365 = vst [vmem:[#allocation2 + $0x68] sm:$0xff] %v349
  %366 = vst [vmem:[#allocation2 + $0x70] sm:$0xff] %v350
  %367 = vst [vmem:[#allocation2 + $0x78] sm:$0xff] %v351
  // Predicated region
  $region26: #{transition_block_forward.7} parent=0 // pred_check
    %p368 = pneg %p21
  $region27: #{transition_block_forward.7} parent=0 // pred_check_branch
    %370 = sbr.rel (%p368) target = $region29
  $region28: #{transition_block_forward.7} parent=0 // pred_region
    %v371 = vld [vmem:[#allocation2] sm:$0xff]
    %v372 = vld [vmem:[#allocation2 + $0x8] sm:$0xff]
    %v373 = vld [vmem:[#allocation2 + $0x10] sm:$0xff]
    %v374 = vld [vmem:[#allocation2 + $0x18] sm:$0xff]
    %v375 = vld [vmem:[#allocation2 + $0x20] sm:$0xff]
    %v376 = vld [vmem:[#allocation2 + $0x28] sm:$0xff]
    %v377 = vld [vmem:[#allocation2 + $0x30] sm:$0xff]
    %v378 = vld [vmem:[#allocation2 + $0x38] sm:$0xff]
    %v379 = vld [vmem:[#allocation2 + $0x40] sm:$0xff]
    %v380 = vld [vmem:[#allocation2 + $0x48] sm:$0xff]
    %v381 = vld [vmem:[#allocation2 + $0x50] sm:$0xff]
    %v382 = vld [vmem:[#allocation2 + $0x58] sm:$0xff]
    %v383 = vld [vmem:[#allocation2 + $0x60] sm:$0xff]
    %v384 = vld [vmem:[#allocation2 + $0x68] sm:$0xff]
    %v385 = vld [vmem:[#allocation2 + $0x70] sm:$0xff]
    %v386 = vld [vmem:[#allocation2 + $0x78] sm:$0xff]
    %v387 = vld [vmem:[%s4] sm:$0x1]
    %v389 = vlaneseq
    %v390 = vshrl.u32 %v389, 7
    %v391 = vsub.s32 0, %v390
    %v392 = vrot.slane %v387, %v391
    %v394 = vadd.f32 %v371, %v392
    %v395 = vadd.f32 %v372, %v392
    %v396 = vadd.f32 %v373, %v392
    %v397 = vadd.f32 %v374, %v392
    %v398 = vadd.f32 %v375, %v392
    %v399 = vadd.f32 %v376, %v392
    %v400 = vadd.f32 %v377, %v392
    %v401 = vadd.f32 %v378, %v392
    %v402 = vadd.f32 %v379, %v392
    %v403 = vadd.f32 %v380, %v392
    %v404 = vadd.f32 %v381, %v392
    %v405 = vadd.f32 %v382, %v392
    %v406 = vadd.f32 %v383, %v392
    %v407 = vadd.f32 %v384, %v392
    %v408 = vadd.f32 %v385, %v392
    %v409 = vadd.f32 %v386, %v392
    %410 = vst [vmem:[%s5] sm:$0xff] %v394
    %411 = vst [vmem:[%s5 + $0x8] sm:$0xff] %v395
    %412 = vst [vmem:[%s5 + $0x10] sm:$0xff] %v396
    %413 = vst [vmem:[%s5 + $0x18] sm:$0xff] %v397
    %414 = vst [vmem:[%s5 + $0x20] sm:$0xff] %v398
    %415 = vst [vmem:[%s5 + $0x28] sm:$0xff] %v399
    %416 = vst [vmem:[%s5 + $0x30] sm:$0xff] %v400
    %417 = vst [vmem:[%s5 + $0x38] sm:$0xff] %v401
    %418 = vst [vmem:[%s5 + $0x40] sm:$0xff] %v402
    %419 = vst [vmem:[%s5 + $0x48] sm:$0xff] %v403
    %420 = vst [vmem:[%s5 + $0x50] sm:$0xff] %v404
    %421 = vst [vmem:[%s5 + $0x58] sm:$0xff] %v405
    %422 = vst [vmem:[%s5 + $0x60] sm:$0xff] %v406
    %423 = vst [vmem:[%s5 + $0x68] sm:$0xff] %v407
    %424 = vst [vmem:[%s5 + $0x70] sm:$0xff] %v408
    %425 = vst [vmem:[%s5 + $0x78] sm:$0xff] %v409
  $region29: #{transition_block_forward.7} parent=0 // pred_fallthru
    _
  // Predicated region
  $region30: #{transition_block_forward.7} parent=0 // pred_check
    _
  $region31: #{transition_block_forward.7} parent=0 // pred_check_branch
    %427 = sbr.rel (0) target = $region33
  $region32: #{transition_block_forward.7} parent=0 // pred_region
    _
  $region33: #{transition_block_forward.7} parent=0 // pred_fallthru
    _
  // Predicated region
  $region34: #{transition_block_forward.7} parent=0 // pred_check
    _
  $region35: #{transition_block_forward.7} parent=0 // pred_check_branch
    %429 = sbr.rel (0) target = $region37
  $region36: #{transition_block_forward.7} parent=0 // pred_region
    _
  $region37: #{transition_block_forward.7} parent=0 // pred_fallthru
    _

// kernel: transition_block_forward.9
$region0: #{transition_block_forward.9}
  #allocation0 [shape = 'u32[]', space=smem, size = 0x4, offset = 0x4, fixed_abs, tag = 'smem constant byte address 0x4 - core index']
  #allocation1 [shape = 'u32[144,128]{1,0:T(1,128)}', space=vmem, size = 0x12000, scoped, tag = 'internal scratch']
  #allocation2 [shape = 'f32[128,128]{1,0:T(8,128)}', space=vmem, size = 0x10000, scoped, tag = 'scratch operand']
  %s0 = inlined_call_operand.vmem [shape: f32[128,128], index: 0, kind: input, shape index: {}]
  %s1 = inlined_call_operand.vmem [shape: f32[1,128], index: 1, kind: input, shape index: {}]
  %s2 = inlined_call_operand.vmem [shape: f32[1,128], index: 2, kind: input, shape index: {}]
  %s3 = inlined_call_operand.vmem [shape: bf16[128,128], index: 3, kind: input, shape index: {}]
  %s4 = inlined_call_operand.vmem [shape: f32[1,128], index: 4, kind: input, shape index: {}]
  %s5 = inlined_call_operand.vmem [shape: f32[128,128], index: 5, kind: input, shape index: {}]
  %s6 = inlined_call_operand.vmem [shape: f32[128,128], index: 6, kind: output, shape index: {}]
  %s7 = sld [smem:[#allocation0]]
  $region42: #{transition_block_forward.9} parent=0
    _
  %s9 = ssub.s32 1, %s7
  %s10 = scalar_select 0, %s9, %s7
  // Predicated region
  $region2: #{transition_block_forward.9} parent=0 // pred_check
    _
  $region3: #{transition_block_forward.9} parent=0 // pred_check_branch
    %12 = sbr.rel (0) target = $region5
  $region4: #{transition_block_forward.9} parent=0 // pred_region
    _
  $region5: #{transition_block_forward.9} parent=0 // pred_fallthru
    _
  // Predicated region
  $region6: #{transition_block_forward.9} parent=0 // pred_check
    _
  $region7: #{transition_block_forward.9} parent=0 // pred_check_branch
    %14 = sbr.rel (0) target = $region9
  $region8: #{transition_block_forward.9} parent=0 // pred_region
    _
  $region9: #{transition_block_forward.9} parent=0 // pred_fallthru
    _
  // Predicated region
  $region10: #{transition_block_forward.9} parent=0 // pred_check
    _
  $region11: #{transition_block_forward.9} parent=0 // pred_check_branch
    %16 = sbr.rel (0) target = $region13
  $region12: #{transition_block_forward.9} parent=0 // pred_region
    _
  $region13: #{transition_block_forward.9} parent=0 // pred_fallthru
    _
  // Predicated region
  $region14: #{transition_block_forward.9} parent=0 // pred_check
    _
  $region15: #{transition_block_forward.9} parent=0 // pred_check_branch
    %18 = sbr.rel (0) target = $region17
  $region16: #{transition_block_forward.9} parent=0 // pred_region
    _
  $region17: #{transition_block_forward.9} parent=0 // pred_fallthru
    _
  // Predicated region
  $region18: #{transition_block_forward.9} parent=0 // pred_check
    _
  $region19: #{transition_block_forward.9} parent=0 // pred_check_branch
    %20 = sbr.rel (0) target = $region21
  $region20: #{transition_block_forward.9} parent=0 // pred_region
    _
  $region21: #{transition_block_forward.9} parent=0 // pred_fallthru
    _
  // Predicated region
  $region22: #{transition_block_forward.9} parent=0 // pred_check
    _
  $region23: #{transition_block_forward.9} parent=0 // pred_check_branch
    %22 = sbr.rel (0) target = $region25
  $region24: #{transition_block_forward.9} parent=0 // pred_region
    _
  $region25: #{transition_block_forward.9} parent=0 // pred_fallthru
    _
  %p24 = scmp.eq.s32.totalorder 0, 0
  // Predicated region
  $region26: #{transition_block_forward.9} parent=0 // pred_check
    %p25 = pneg %p24
  $region27: #{transition_block_forward.9} parent=0 // pred_check_branch
    %27 = sbr.rel (%p25) target = $region29
  $region28: #{transition_block_forward.9} parent=0 // pred_region
    %28 = vst [vmem:[#allocation2] sm:$0xff] 0.0
    %29 = vst [vmem:[#allocation2 + $0x8] sm:$0xff] 0.0
    %30 = vst [vmem:[#allocation2 + $0x10] sm:$0xff] 0.0
    %31 = vst [vmem:[#allocation2 + $0x18] sm:$0xff] 0.0
    %32 = vst [vmem:[#allocation2 + $0x20] sm:$0xff] 0.0
    %33 = vst [vmem:[#allocation2 + $0x28] sm:$0xff] 0.0
    %34 = vst [vmem:[#allocation2 + $0x30] sm:$0xff] 0.0
    %35 = vst [vmem:[#allocation2 + $0x38] sm:$0xff] 0.0
    %36 = vst [vmem:[#allocation2 + $0x40] sm:$0xff] 0.0
    %37 = vst [vmem:[#allocation2 + $0x48] sm:$0xff] 0.0
    %38 = vst [vmem:[#allocation2 + $0x50] sm:$0xff] 0.0
    %39 = vst [vmem:[#allocation2 + $0x58] sm:$0xff] 0.0
    %40 = vst [vmem:[#allocation2 + $0x60] sm:$0xff] 0.0
    %41 = vst [vmem:[#allocation2 + $0x68] sm:$0xff] 0.0
    %42 = vst [vmem:[#allocation2 + $0x70] sm:$0xff] 0.0
    %43 = vst [vmem:[#allocation2 + $0x78] sm:$0xff] 0.0
  $region29: #{transition_block_forward.9} parent=0 // pred_fallthru
    _
  %v44 = vld [vmem:[%s0] sm:$0xff]
  %v45 = vld [vmem:[%s0 + $0x8] sm:$0xff]
  %v46 = vld [vmem:[%s0 + $0x10] sm:$0xff]
  %v47 = vld [vmem:[%s0 + $0x18] sm:$0xff]
  %v48 = vld [vmem:[%s0 + $0x20] sm:$0xff]
  %v49 = vld [vmem:[%s0 + $0x28] sm:$0xff]
  %v50 = vld [vmem:[%s0 + $0x30] sm:$0xff]
  %v51 = vld [vmem:[%s0 + $0x38] sm:$0xff]
  %v52 = vld [vmem:[%s0 + $0x40] sm:$0xff]
  %v53 = vld [vmem:[%s0 + $0x48] sm:$0xff]
  %v54 = vld [vmem:[%s0 + $0x50] sm:$0xff]
  %v55 = vld [vmem:[%s0 + $0x58] sm:$0xff]
  %v56 = vld [vmem:[%s0 + $0x60] sm:$0xff]
  %v57 = vld [vmem:[%s0 + $0x68] sm:$0xff]
  %v58 = vld [vmem:[%s0 + $0x70] sm:$0xff]
  %v59 = vld [vmem:[%s0 + $0x78] sm:$0xff]
  %v60 = vld [vmem:[%s1] sm:$0x1]
  %v62 = vlaneseq
  %v63 = vshrl.u32 %v62, 7
  %v64 = vsub.s32 0, %v63
  %v65 = vrot.slane %v60, %v64
  %v67 = vmul.f32 %v44, %v65
  %v68 = vmul.f32 %v45, %v65
  %v69 = vmul.f32 %v46, %v65
  %v70 = vmul.f32 %v47, %v65
  %v71 = vmul.f32 %v48, %v65
  %v72 = vmul.f32 %v49, %v65
  %v73 = vmul.f32 %v50, %v65
  %v74 = vmul.f32 %v51, %v65
  %v75 = vmul.f32 %v52, %v65
  %v76 = vmul.f32 %v53, %v65
  %v77 = vmul.f32 %v54, %v65
  %v78 = vmul.f32 %v55, %v65
  %v79 = vmul.f32 %v56, %v65
  %v80 = vmul.f32 %v57, %v65
  %v81 = vmul.f32 %v58, %v65
  %v82 = vmul.f32 %v59, %v65
  %v83 = vld [vmem:[%s2] sm:$0x1]
  %v85 = vlaneseq
  %v86 = vshrl.u32 %v85, 7
  %v87 = vsub.s32 0, %v86
  %v88 = vrot.slane %v83, %v87
  %v90 = vadd.f32 %v67, %v88
  %v91 = vadd.f32 %v68, %v88
  %v92 = vadd.f32 %v69, %v88
  %v93 = vadd.f32 %v70, %v88
  %v94 = vadd.f32 %v71, %v88
  %v95 = vadd.f32 %v72, %v88
  %v96 = vadd.f32 %v73, %v88
  %v97 = vadd.f32 %v74, %v88
  %v98 = vadd.f32 %v75, %v88
  %v99 = vadd.f32 %v76, %v88
  %v100 = vadd.f32 %v77, %v88
  %v101 = vadd.f32 %v78, %v88
  %v102 = vadd.f32 %v79, %v88
  %v103 = vadd.f32 %v80, %v88
  %v104 = vadd.f32 %v81, %v88
  %v105 = vadd.f32 %v82, %v88
  %vm106 = vcmp.gt.f32.partialorder %v90, 0.0
  %vm107 = vcmp.gt.f32.partialorder %v91, 0.0
  %vm108 = vcmp.gt.f32.partialorder %v92, 0.0
  %vm109 = vcmp.gt.f32.partialorder %v93, 0.0
  %vm110 = vcmp.gt.f32.partialorder %v94, 0.0
  %vm111 = vcmp.gt.f32.partialorder %v95, 0.0
  %vm112 = vcmp.gt.f32.partialorder %v96, 0.0
  %vm113 = vcmp.gt.f32.partialorder %v97, 0.0
  %vm114 = vcmp.gt.f32.partialorder %v98, 0.0
  %vm115 = vcmp.gt.f32.partialorder %v99, 0.0
  %vm116 = vcmp.gt.f32.partialorder %v100, 0.0
  %vm117 = vcmp.gt.f32.partialorder %v101, 0.0
  %vm118 = vcmp.gt.f32.partialorder %v102, 0.0
  %vm119 = vcmp.gt.f32.partialorder %v103, 0.0
  %vm120 = vcmp.gt.f32.partialorder %v104, 0.0
  %vm121 = vcmp.gt.f32.partialorder %v105, 0.0
  %v122 = vmul.f32 %v90, 0.1
  %v123 = vmul.f32 %v91, 0.1
  %v124 = vmul.f32 %v92, 0.1
  %v125 = vmul.f32 %v93, 0.1
  %v126 = vmul.f32 %v94, 0.1
  %v127 = vmul.f32 %v95, 0.1
  %v128 = vmul.f32 %v96, 0.1
  %v129 = vmul.f32 %v97, 0.1
  %v130 = vmul.f32 %v98, 0.1
  %v131 = vmul.f32 %v99, 0.1
  %v132 = vmul.f32 %v100, 0.1
  %v133 = vmul.f32 %v101, 0.1
  %v134 = vmul.f32 %v102, 0.1
  %v135 = vmul.f32 %v103, 0.1
  %v136 = vmul.f32 %v104, 0.1
  %v137 = vmul.f32 %v105, 0.1
  %v138 = vsel %vm106, %v90, %v122
  %v139 = vsel %vm107, %v91, %v123
  %v140 = vsel %vm108, %v92, %v124
  %v141 = vsel %vm109, %v93, %v125
  %v142 = vsel %vm110, %v94, %v126
  %v143 = vsel %vm111, %v95, %v127
  %v144 = vsel %vm112, %v96, %v128
  %v145 = vsel %vm113, %v97, %v129
  %v146 = vsel %vm114, %v98, %v130
  %v147 = vsel %vm115, %v99, %v131
  %v148 = vsel %vm116, %v100, %v132
  %v149 = vsel %vm117, %v101, %v133
  %v150 = vsel %vm118, %v102, %v134
  %v151 = vsel %vm119, %v103, %v135
  %v152 = vsel %vm120, %v104, %v136
  %v153 = vsel %vm121, %v105, %v137
  %v154 = vld [vmem:[#allocation2] sm:$0xff]
  %v155 = vld [vmem:[#allocation2 + $0x8] sm:$0xff]
  %v156 = vld [vmem:[#allocation2 + $0x10] sm:$0xff]
  %v157 = vld [vmem:[#allocation2 + $0x18] sm:$0xff]
  %v158 = vld [vmem:[#allocation2 + $0x20] sm:$0xff]
  %v159 = vld [vmem:[#allocation2 + $0x28] sm:$0xff]
  %v160 = vld [vmem:[#allocation2 + $0x30] sm:$0xff]
  %v161 = vld [vmem:[#allocation2 + $0x38] sm:$0xff]
  %v162 = vld [vmem:[#allocation2 + $0x40] sm:$0xff]
  %v163 = vld [vmem:[#allocation2 + $0x48] sm:$0xff]
  %v164 = vld [vmem:[#allocation2 + $0x50] sm:$0xff]
  %v165 = vld [vmem:[#allocation2 + $0x58] sm:$0xff]
  %v166 = vld [vmem:[#allocation2 + $0x60] sm:$0xff]
  %v167 = vld [vmem:[#allocation2 + $0x68] sm:$0xff]
  %v168 = vld [vmem:[#allocation2 + $0x70] sm:$0xff]
  %v169 = vld [vmem:[#allocation2 + $0x78] sm:$0xff]
  %v170 = vpack.c.bf16 %v139, %v138
  %v171 = vpack.c.bf16 %v141, %v140
  %v172 = vpack.c.bf16 %v143, %v142
  %v173 = vpack.c.bf16 %v145, %v144
  %v174 = vpack.c.bf16 %v147, %v146
  %v175 = vpack.c.bf16 %v149, %v148
  %v176 = vpack.c.bf16 %v151, %v150
  %v177 = vpack.c.bf16 %v153, %v152
  %v178 = vld [vmem:[%s3] sm:$0xf]
  %v179 = vld [vmem:[%s3 + $0x4] sm:$0xf]
  %v180 = vld [vmem:[%s3 + $0x8] sm:$0xf]
  %v181 = vld [vmem:[%s3 + $0xc] sm:$0xf]
  %v182 = vld [vmem:[%s3 + $0x10] sm:$0xf]
  %v183 = vld [vmem:[%s3 + $0x14] sm:$0xf]
  %v184 = vld [vmem:[%s3 + $0x18] sm:$0xf]
  %v185 = vld [vmem:[%s3 + $0x1c] sm:$0xf]
  %v186 = vld [vmem:[%s3 + $0x20] sm:$0xf]
  %v187 = vld [vmem:[%s3 + $0x24] sm:$0xf]
  %v188 = vld [vmem:[%s3 + $0x28] sm:$0xf]
  %v189 = vld [vmem:[%s3 + $0x2c] sm:$0xf]
  %v190 = vld [vmem:[%s3 + $0x30] sm:$0xf]
  %v191 = vld [vmem:[%s3 + $0x34] sm:$0xf]
  %v192 = vld [vmem:[%s3 + $0x38] sm:$0xf]
  %v193 = vld [vmem:[%s3 + $0x3c] sm:$0xf]
  %v210 = vunpack.c.l.b16 %v178
  %v211 = vunpack.c.l.b16 %v179
  %v212 = vunpack.c.l.b16 %v180
  %v213 = vunpack.c.l.b16 %v181
  %v214 = vunpack.c.l.b16 %v182
  %v215 = vunpack.c.l.b16 %v183
  %v216 = vunpack.c.l.b16 %v184
  %v217 = vunpack.c.l.b16 %v185
  %v218 = vunpack.c.l.b16 %v186
  %v219 = vunpack.c.l.b16 %v187
  %v220 = vunpack.c.l.b16 %v188
  %v221 = vunpack.c.l.b16 %v189
  %v222 = vunpack.c.l.b16 %v190
  %v223 = vunpack.c.l.b16 %v191
  %v224 = vunpack.c.l.b16 %v192
  %v225 = vunpack.c.l.b16 %v193
  %v226 = vpack.c.b16 %v211, %v210
  %v227 = vpack.c.b16 %v213, %v212
  %v228 = vpack.c.b16 %v215, %v214
  %v229 = vpack.c.b16 %v217, %v216
  %v230 = vpack.c.b16 %v219, %v218
  %v231 = vpack.c.b16 %v221, %v220
  %v232 = vpack.c.b16 %v223, %v222
  %v233 = vpack.c.b16 %v225, %v224
  %242 = vmatprep.subr.bf16.mxu0 0
  %243 = vmatpush1.bf16.msra.mxu0 %v233
  %244 = vmatprep.subr.bf16.mxu0 0
  %245 = vmatpush1.bf16.msra.mxu0 %v232
  %246 = vmatprep.subr.bf16.mxu0 0
  %247 = vmatpush1.bf16.msra.mxu0 %v231
  %248 = vmatprep.subr.bf16.mxu0 0
  %249 = vmatpush1.bf16.msra.mxu0 %v230
  %250 = vmatprep.subr.bf16.mxu0 0
  %251 = vmatpush1.bf16.msra.mxu0 %v229
  %252 = vmatprep.subr.bf16.mxu0 0
  %253 = vmatpush1.bf16.msra.mxu0 %v228
  %254 = vmatprep.subr.bf16.mxu0 0
  %255 = vmatpush1.bf16.msra.mxu0 %v227
  %256 = vmatprep.subr.bf16.mxu0 0
  %257 = vmatpush1.bf16.msra.mxu0 %v226
  %258 = vmatprep.subr.bf16.mxu0 0
  %259 = vmatpush2.bf16.msra.mxu0 0
  %260 = vmatprep.subr.bf16.mxu0 0
  %261 = vmatpush2.bf16.msra.mxu0 0
  %262 = vmatprep.subr.bf16.mxu0 0
  %263 = vmatpush2.bf16.msra.mxu0 0
  %264 = vmatprep.subr.bf16.mxu0 0
  %265 = vmatpush2.bf16.msra.mxu0 0
  %266 = vmatprep.subr.bf16.mxu0 0
  %267 = vmatpush2.bf16.msra.mxu0 0
  %268 = vmatprep.subr.bf16.mxu0 0
  %269 = vmatpush2.bf16.msra.mxu0 0
  %270 = vmatprep.subr.bf16.mxu0 0
  %271 = vmatpush2.bf16.msra.mxu0 0
  %272 = vmatprep.subr.bf16.mxu0 0
  %273 = vmatpush2.bf16.msra.mxu0 0
  %274 = vmatprep.mubr.bf16.mxu0 0
  %275 = vmatmul.mubr.bf16.gmra.mxu0 %v170
  %v276 = vpop.f32.mrf.mxu0
  %v277 = vadd.f32 0.0, %v276
  %v278 = vpop.f32.mrf.mxu0
  %v279 = vpop.f32.mrf.mxu0
  %v280 = vadd.f32 0.0, %v279
  %v281 = vpop.f32.mrf.mxu0
  %282 = vmatprep.mubr.bf16.mxu0 0
  %283 = vmatmul.mubr.bf16.gmra.mxu0 %v171
  %v284 = vpop.f32.mrf.mxu0
  %v285 = vadd.f32 0.0, %v284
  %v286 = vpop.f32.mrf.mxu0
  %v287 = vpop.f32.mrf.mxu0
  %v288 = vadd.f32 0.0, %v287
  %v289 = vpop.f32.mrf.mxu0
  %290 = vmatprep.mubr.bf16.mxu0 0
  %291 = vmatmul.mubr.bf16.gmra.mxu0 %v172
  %v292 = vpop.f32.mrf.mxu0
  %v293 = vadd.f32 0.0, %v292
  %v294 = vpop.f32.mrf.mxu0
  %v295 = vpop.f32.mrf.mxu0
  %v296 = vadd.f32 0.0, %v295
  %v297 = vpop.f32.mrf.mxu0
  %298 = vmatprep.mubr.bf16.mxu0 0
  %299 = vmatmul.mubr.bf16.gmra.mxu0 %v173
  %v300 = vpop.f32.mrf.mxu0
  %v301 = vadd.f32 0.0, %v300
  %v302 = vpop.f32.mrf.mxu0
  %v303 = vpop.f32.mrf.mxu0
  %v304 = vadd.f32 0.0, %v303
  %v305 = vpop.f32.mrf.mxu0
  %306 = vmatprep.mubr.bf16.mxu0 0
  %307 = vmatmul.mubr.bf16.gmra.mxu0 %v174
  %v308 = vpop.f32.mrf.mxu0
  %v309 = vadd.f32 0.0, %v308
  %v310 = vpop.f32.mrf.mxu0
  %v311 = vpop.f32.mrf.mxu0
  %v312 = vadd.f32 0.0, %v311
  %v313 = vpop.f32.mrf.mxu0
  %314 = vmatprep.mubr.bf16.mxu0 0
  %315 = vmatmul.mubr.bf16.gmra.mxu0 %v175
  %v316 = vpop.f32.mrf.mxu0
  %v317 = vadd.f32 0.0, %v316
  %v318 = vpop.f32.mrf.mxu0
  %v319 = vpop.f32.mrf.mxu0
  %v320 = vadd.f32 0.0, %v319
  %v321 = vpop.f32.mrf.mxu0
  %322 = vmatprep.mubr.bf16.mxu0 0
  %323 = vmatmul.mubr.bf16.gmra.mxu0 %v176
  %v324 = vpop.f32.mrf.mxu0
  %v325 = vadd.f32 0.0, %v324
  %v326 = vpop.f32.mrf.mxu0
  %v327 = vpop.f32.mrf.mxu0
  %v328 = vadd.f32 0.0, %v327
  %v329 = vpop.f32.mrf.mxu0
  %330 = vmatprep.mubr.bf16.mxu0 0
  %331 = vmatmul.mubr.bf16.gmra.mxu0 %v177
  %v332 = vpop.f32.mrf.mxu0
  %v333 = vadd.f32 0.0, %v332
  %v334 = vpop.f32.mrf.mxu0
  %v335 = vpop.f32.mrf.mxu0
  %v336 = vadd.f32 0.0, %v335
  %v337 = vpop.f32.mrf.mxu0
  %338 = vdwg.mxu0
  %v339 = vadd.f32 %v154, %v277
  %v340 = vadd.f32 %v155, %v280
  %v341 = vadd.f32 %v156, %v285
  %v342 = vadd.f32 %v157, %v288
  %v343 = vadd.f32 %v158, %v293
  %v344 = vadd.f32 %v159, %v296
  %v345 = vadd.f32 %v160, %v301
  %v346 = vadd.f32 %v161, %v304
  %v347 = vadd.f32 %v162, %v309
  %v348 = vadd.f32 %v163, %v312
  %v349 = vadd.f32 %v164, %v317
  %v350 = vadd.f32 %v165, %v320
  %v351 = vadd.f32 %v166, %v325
  %v352 = vadd.f32 %v167, %v328
  %v353 = vadd.f32 %v168, %v333
  %v354 = vadd.f32 %v169, %v336
  %355 = vst [vmem:[#allocation2] sm:$0xff] %v339
  %356 = vst [vmem:[#allocation2 + $0x8] sm:$0xff] %v340
  %357 = vst [vmem:[#allocation2 + $0x10] sm:$0xff] %v341
  %358 = vst [vmem:[#allocation2 + $0x18] sm:$0xff] %v342
  %359 = vst [vmem:[#allocation2 + $0x20] sm:$0xff] %v343
  %360 = vst [vmem:[#allocation2 + $0x28] sm:$0xff] %v344
  %361 = vst [vmem:[#allocation2 + $0x30] sm:$0xff] %v345
  %362 = vst [vmem:[#allocation2 + $0x38] sm:$0xff] %v346
  %363 = vst [vmem:[#allocation2 + $0x40] sm:$0xff] %v347
  %364 = vst [vmem:[#allocation2 + $0x48] sm:$0xff] %v348
  %365 = vst [vmem:[#allocation2 + $0x50] sm:$0xff] %v349
  %366 = vst [vmem:[#allocation2 + $0x58] sm:$0xff] %v350
  %367 = vst [vmem:[#allocation2 + $0x60] sm:$0xff] %v351
  %368 = vst [vmem:[#allocation2 + $0x68] sm:$0xff] %v352
  %369 = vst [vmem:[#allocation2 + $0x70] sm:$0xff] %v353
  %370 = vst [vmem:[#allocation2 + $0x78] sm:$0xff] %v354
  // Predicated region
  $region30: #{transition_block_forward.9} parent=0 // pred_check
    %p371 = pneg %p24
  $region31: #{transition_block_forward.9} parent=0 // pred_check_branch
    %373 = sbr.rel (%p371) target = $region33
  $region32: #{transition_block_forward.9} parent=0 // pred_region
    %v374 = vld [vmem:[#allocation2] sm:$0xff]
    %v375 = vld [vmem:[#allocation2 + $0x8] sm:$0xff]
    %v376 = vld [vmem:[#allocation2 + $0x10] sm:$0xff]
    %v377 = vld [vmem:[#allocation2 + $0x18] sm:$0xff]
    %v378 = vld [vmem:[#allocation2 + $0x20] sm:$0xff]
    %v379 = vld [vmem:[#allocation2 + $0x28] sm:$0xff]
    %v380 = vld [vmem:[#allocation2 + $0x30] sm:$0xff]
    %v381 = vld [vmem:[#allocation2 + $0x38] sm:$0xff]
    %v382 = vld [vmem:[#allocation2 + $0x40] sm:$0xff]
    %v383 = vld [vmem:[#allocation2 + $0x48] sm:$0xff]
    %v384 = vld [vmem:[#allocation2 + $0x50] sm:$0xff]
    %v385 = vld [vmem:[#allocation2 + $0x58] sm:$0xff]
    %v386 = vld [vmem:[#allocation2 + $0x60] sm:$0xff]
    %v387 = vld [vmem:[#allocation2 + $0x68] sm:$0xff]
    %v388 = vld [vmem:[#allocation2 + $0x70] sm:$0xff]
    %v389 = vld [vmem:[#allocation2 + $0x78] sm:$0xff]
    %v390 = vld [vmem:[%s4] sm:$0x1]
    %v392 = vlaneseq
    %v393 = vshrl.u32 %v392, 7
    %v394 = vsub.s32 0, %v393
    %v395 = vrot.slane %v390, %v394
    %v397 = vadd.f32 %v374, %v395
    %v398 = vadd.f32 %v375, %v395
    %v399 = vadd.f32 %v376, %v395
    %v400 = vadd.f32 %v377, %v395
    %v401 = vadd.f32 %v378, %v395
    %v402 = vadd.f32 %v379, %v395
    %v403 = vadd.f32 %v380, %v395
    %v404 = vadd.f32 %v381, %v395
    %v405 = vadd.f32 %v382, %v395
    %v406 = vadd.f32 %v383, %v395
    %v407 = vadd.f32 %v384, %v395
    %v408 = vadd.f32 %v385, %v395
    %v409 = vadd.f32 %v386, %v395
    %v410 = vadd.f32 %v387, %v395
    %v411 = vadd.f32 %v388, %v395
    %v412 = vadd.f32 %v389, %v395
    %v413 = vld [vmem:[%s5] sm:$0xff]
    %v414 = vld [vmem:[%s5 + $0x8] sm:$0xff]
    %v415 = vld [vmem:[%s5 + $0x10] sm:$0xff]
    %v416 = vld [vmem:[%s5 + $0x18] sm:$0xff]
    %v417 = vld [vmem:[%s5 + $0x20] sm:$0xff]
    %v418 = vld [vmem:[%s5 + $0x28] sm:$0xff]
    %v419 = vld [vmem:[%s5 + $0x30] sm:$0xff]
    %v420 = vld [vmem:[%s5 + $0x38] sm:$0xff]
    %v421 = vld [vmem:[%s5 + $0x40] sm:$0xff]
    %v422 = vld [vmem:[%s5 + $0x48] sm:$0xff]
    %v423 = vld [vmem:[%s5 + $0x50] sm:$0xff]
    %v424 = vld [vmem:[%s5 + $0x58] sm:$0xff]
    %v425 = vld [vmem:[%s5 + $0x60] sm:$0xff]
    %v426 = vld [vmem:[%s5 + $0x68] sm:$0xff]
    %v427 = vld [vmem:[%s5 + $0x70] sm:$0xff]
    %v428 = vld [vmem:[%s5 + $0x78] sm:$0xff]
    %v429 = vadd.f32 %v397, %v413
    %v430 = vadd.f32 %v398, %v414
    %v431 = vadd.f32 %v399, %v415
    %v432 = vadd.f32 %v400, %v416
    %v433 = vadd.f32 %v401, %v417
    %v434 = vadd.f32 %v402, %v418
    %v435 = vadd.f32 %v403, %v419
    %v436 = vadd.f32 %v404, %v420
    %v437 = vadd.f32 %v405, %v421
    %v438 = vadd.f32 %v406, %v422
    %v439 = vadd.f32 %v407, %v423
    %v440 = vadd.f32 %v408, %v424
    %v441 = vadd.f32 %v409, %v425
    %v442 = vadd.f32 %v410, %v426
    %v443 = vadd.f32 %v411, %v427
    %v444 = vadd.f32 %v412, %v428
    %445 = vst [vmem:[%s6] sm:$0xff] %v429
    %446 = vst [vmem:[%s6 + $0x8] sm:$0xff] %v430
    %447 = vst [vmem:[%s6 + $0x10] sm:$0xff] %v431
    %448 = vst [vmem:[%s6 + $0x18] sm:$0xff] %v432
    %449 = vst [vmem:[%s6 + $0x20] sm:$0xff] %v433
    %450 = vst [vmem:[%s6 + $0x28] sm:$0xff] %v434
    %451 = vst [vmem:[%s6 + $0x30] sm:$0xff] %v435
    %452 = vst [vmem:[%s6 + $0x38] sm:$0xff] %v436
    %453 = vst [vmem:[%s6 + $0x40] sm:$0xff] %v437
    %454 = vst [vmem:[%s6 + $0x48] sm:$0xff] %v438
    %455 = vst [vmem:[%s6 + $0x50] sm:$0xff] %v439
    %456 = vst [vmem:[%s6 + $0x58] sm:$0xff] %v440
    %457 = vst [vmem:[%s6 + $0x60] sm:$0xff] %v441
    %458 = vst [vmem:[%s6 + $0x68] sm:$0xff] %v442
    %459 = vst [vmem:[%s6 + $0x70] sm:$0xff] %v443
    %460 = vst [vmem:[%s6 + $0x78] sm:$0xff] %v444
  $region33: #{transition_block_forward.9} parent=0 // pred_fallthru
    _
  // Predicated region
  $region34: #{transition_block_forward.9} parent=0 // pred_check
    _
  $region35: #{transition_block_forward.9} parent=0 // pred_check_branch
    %462 = sbr.rel (0) target = $region37
  $region36: #{transition_block_forward.9} parent=0 // pred_region
    _
  $region37: #{transition_block_forward.9} parent=0 // pred_fallthru
    _
  // Predicated region
  $region38: #{transition_block_forward.9} parent=0 // pred_check
    _
  $region39: #{transition_block_forward.9} parent=0 // pred_check_branch
    %464 = sbr.rel (0) target = $region41
  $region40: #{transition_block_forward.9} parent=0 // pred_region
    _
  $region41: #{transition_block_forward.9} parent=0 // pred_fallthru
    _

</llo_original>
